<compile_context>
chip_gen: v7x
topology: tpu7x:2x2x1
jax: 0.10.0
libtpu: 0.0.40
codegen_flags: <defaults>
</compile_context>

<pallas_src>
import itertools
import math

import jax
import jax.numpy as jnp
from jax.experimental import pallas as pl
from jax.experimental.pallas import tpu as pltpu

_LANE = 128
_SUBLANE = 8
_MIN_BLOCK = _SUBLANE * _LANE          # 1024 atoms = one minimal (8,128) slab
_DEFAULT_TILE_ATOMS = 512 * _LANE      # TM=512 -> ~11 MiB double-buffered/step

# 27 periodic images (same lexicographic order as the PyTorch SUPERCELLS buffer)
_SUPERCELLS = tuple(itertools.product((-1, 0, 1), repeat=3))
# 13 canonical +/- pair representatives (first nonzero component == +1);
# s = (0,0,0) is the initialisation of the running minimum.
_PAIR_REPS = tuple(s for s in _SUPERCELLS if s > (0, 0, 0))


def make_ve_sigmas(num_steps, sigma_min, sigma_max):
    """Re-creates the `sigmas` buffer registered in VE_pbc.__init__ (pure JAX glue)."""
    return jnp.exp(
        jnp.linspace(math.log(sigma_min), math.log(sigma_max), num_steps + 1)
    ).astype(jnp.float32)


def _ve_pbc_fwd_kernel(x_ref, eps_ref, sig_ref, lat_ref, fn_ref, wf_ref):
    # Refs (per tile): x/eps/fn/wf: (3, TM, 128); sig: (1, TM, 128);
    #                  lat:         (9, TM, 128) with row 3*i+j == L[i, j].
    sigma = sig_ref[0]                                     # (TM, 128)

    x = [x_ref[i] for i in range(3)]
    f = []
    for i in range(3):
        v = x[i] + eps_ref[i] * sigma
        v = v - jnp.floor(v)                               # (frac + eps) % 1 (pure VALU)
        fn_ref[i] = v
        f.append(v)

    L = [[lat_ref[3 * i + j] for j in range(3)] for i in range(3)]

    # d = cart_noisy - cart_p = (frac_noisy - frac_x0) @ L  (per-atom lattice)
    df = [f[i] - x[i] for i in range(3)]
    d = [df[0] * L[0][j] + df[1] * L[1][j] + df[2] * L[2][j] for j in range(3)]

    # Quadratic-form precompute for the 27-image search:
    #   dist(s) = |d|^2 - 2 s.a + s^T G s,  a_i = d.L_i,  G_ik = L_i.L_k
    a = [d[0] * L[i][0] + d[1] * L[i][1] + d[2] * L[i][2] for i in range(3)]
    d0 = d[0] * d[0] + d[1] * d[1] + d[2] * d[2]
    g = {}
    for i in range(3):
        for k in range(i, 3):
            g[(i, k)] = L[i][0] * L[k][0] + L[i][1] * L[k][1] + L[i][2] * L[k][2]
    diag = (g[(0, 0)], g[(1, 1)], g[(2, 2)])
    offd = {(0, 1): g[(0, 1)] + g[(0, 1)],
            (0, 2): g[(0, 2)] + g[(0, 2)],
            (1, 2): g[(1, 2)] + g[(1, 2)]}

    zero = jnp.zeros_like(d0)
    best_d = d0                                            # s = (0,0,0) baseline
    bs = [zero, zero, zero]

    # 13 unrolled +/- image pairs; Q(s) = Q(-s) shared within a pair.
    # (Visit order differs from torch's lexicographic argmin; ties resolve to a
    #  different image but the mod-1 output is image-independent, so the result
    #  is unchanged up to fp rounding.)
    for s in _PAIR_REPS:
        sa = None
        q = None
        for i in range(3):
            if s[i] == 0:
                continue
            ai = a[i] if s[i] == 1 else -a[i]
            sa = ai if sa is None else sa + ai
            q = diag[i] if q is None else q + diag[i]
        for (i, k), h in offd.items():
            p = s[i] * s[k]
            if p == 1:
                q = q + h
            elif p == -1:
                q = q - h
        base = d0 + q
        two_sa = sa + sa
        for sgn, dist in ((1, base - two_sa), (-1, base + two_sa)):
            take = dist < best_d                           # strict '<': first min kept
            best_d = jnp.minimum(dist, best_d)
            bs = [jnp.where(take, float(sgn * s[i]), bs[i]) for i in range(3)]

    # Reconstruct the winning vector once: min_vec = d - best_s @ L
    mv = [d[j] - (bs[0] * L[0][j] + bs[1] * L[1][j] + bs[2] * L[2][j])
          for j in range(3)]

    # In-kernel 3x3 inverse via cofactors + reciprocal (replaces the streamed
    # per-atom pinv).  Padded atoms carry an identity lattice, so det != 0.
    c00 = L[1][1] * L[2][2] - L[1][2] * L[2][1]
    c01 = L[1][2] * L[2][0] - L[1][0] * L[2][2]
    c02 = L[1][0] * L[2][1] - L[1][1] * L[2][0]
    c10 = L[0][2] * L[2][1] - L[0][1] * L[2][2]
    c11 = L[0][0] * L[2][2] - L[0][2] * L[2][0]
    c12 = L[0][1] * L[2][0] - L[0][0] * L[2][1]
    c20 = L[0][1] * L[1][2] - L[0][2] * L[1][1]
    c21 = L[0][2] * L[1][0] - L[0][0] * L[1][2]
    c22 = L[0][0] * L[1][1] - L[0][1] * L[1][0]
    det = L[0][0] * c00 + L[0][1] * c01 + L[0][2] * c02
    inv_det = pl.reciprocal(det, approx=False)             # full precision

    # wrapped_frac_eps = (min_vec @ L^-1) % 1 ;  (L^-1)[j][k] = C[k][j] / det
    w = (mv[0] * c00 + mv[1] * c01 + mv[2] * c02) * inv_det
    wf_ref[0] = w - jnp.floor(w)
    w = (mv[0] * c10 + mv[1] * c11 + mv[2] * c12) * inv_det
    wf_ref[1] = w - jnp.floor(w)
    w = (mv[0] * c20 + mv[1] * c21 + mv[2] * c22) * inv_det
    wf_ref[2] = w - jnp.floor(w)


def _round_up(x, m):
    return ((x + m - 1) // m) * m


def ve_pbc_forward(sigmas, frac_x0, t, lattice, num_atoms, eps_raw,
                   *, tile_atoms=_DEFAULT_TILE_ATOMS):
    """Pallas equivalent of VE_pbc.forward.

    sigmas    : (T+1,) noise schedule
    frac_x0   : (N, 3) fractional coords of all atoms (concatenated over batch)
    t         : (N,)   per-atom timestep indices
    lattice   : (B, 3, 3)
    num_atoms : (B,)   atoms per structure (sum == N)
    eps_raw   : (N, 3) standard-normal noise (torch.randn_like equivalent)
    returns (frac_noisy (N,3), wrapped_frac_eps_x (N,3), used_sigmas (N,1))
    """
    f32 = jnp.float32
    n = frac_x0.shape[0]

    used_sigmas = sigmas[t].astype(f32).reshape(-1, 1)                      # (N, 1)

    # ---- tiling: atoms folded onto (sublane, lane) = (TM, 128) slabs ----
    tile_atoms = _round_up(max(int(tile_atoms), _MIN_BLOCK), _MIN_BLOCK)
    n_ceil = _round_up(n, _MIN_BLOCK)
    two_way = _round_up(-(-n_ceil // 2), _MIN_BLOCK)  # >=2 grid steps when possible
    n_block = min(tile_atoms, max(two_way, _MIN_BLOCK))                     # (both v7x TCs busy)
    n_pad = _round_up(n, n_block)
    tm = n_block // _LANE                                                   # multiple of 8
    grid = (n_pad // n_block,)
    m_total = n_pad // _LANE
    pad = n_pad - n

    def lanes(rows_by_n):                                                   # (R, N) -> (R, M, 128)
        r = rows_by_n.shape[0]
        if pad:
            rows_by_n = jnp.pad(rows_by_n, ((0, 0), (0, pad)))
        return rows_by_n.reshape(r, m_total, _LANE)

    # Lane-major inputs built directly (one layout pass per array).
    x_l = lanes(frac_x0.astype(f32).T)                                      # (3, M, 128)
    e_l = lanes(eps_raw.astype(f32).T)                                      # (3, M, 128)
    s_l = lanes(used_sigmas.T)                                              # (1, M, 128)

    # Per-atom lattice: repeat (9, B) columns over atoms (no extra transpose),
    # identity-pad so the in-kernel cofactor inverse never sees det == 0.
    # TODO(synk): the ragged repeat over num_atoms stays in XLA (no clean Pallas win).
    lat_rows = jnp.repeat(lattice.astype(f32).reshape(-1, 9).T, num_atoms,
                          axis=1, total_repeat_length=n)                    # (9, N)
    if pad:
        eye9 = jnp.eye(3, dtype=f32).reshape(9, 1)
        lat_rows = jnp.concatenate([lat_rows, jnp.tile(eye9, (1, pad))], axis=1)
    l_l = lat_rows.reshape(9, m_total, _LANE)                               # (9, M, 128)

    def spec(rows):
        return pl.BlockSpec((rows, tm, _LANE), lambda i: (0, i, 0))

    # TODO(synk): eps could be generated in-kernel (pltpu.prng_* + Box-Muller on
    # the idle EUP) to drop another 12 B/atom, at the cost of not matching an
    # externally supplied noise stream; kept as an input for determinism.
    fn_l, wf_l = pl.pallas_call(
        _ve_pbc_fwd_kernel,
        out_shape=(
            jax.ShapeDtypeStruct((3, m_total, _LANE), f32),
            jax.ShapeDtypeStruct((3, m_total, _LANE), f32),
        ),
        grid_spec=pltpu.PrefetchScalarGridSpec(
            num_scalar_prefetch=0,
            grid=grid,
            in_specs=[spec(3), spec(3), spec(1), spec(9)],
            out_specs=[spec(3), spec(3)],
        ),
        compiler_params=pltpu.CompilerParams(
            dimension_semantics=("parallel",),   # independent atom tiles -> both TCs on v7x
            vmem_limit_bytes=32 * 1024 * 1024,
        ),
    )(x_l, e_l, s_l, l_l)

    frac_noisy = fn_l.reshape(3, n_pad)[:, :n].T
    wrapped_frac_eps_x = wf_l.reshape(3, n_pad)[:, :n].T
    return frac_noisy, wrapped_frac_eps_x, used_sigmas


def _ref_forward(sigmas, frac_x0, t, lattice, num_atoms, eps_raw):
    """Pure-JAX mirror of the PyTorch VE_pbc.forward (same eps)."""
    n = frac_x0.shape[0]
    used_sigmas = sigmas[t].reshape(-1, 1)
    eps_x = eps_raw * used_sigmas
    frac_noisy = jnp.mod(frac_x0 + eps_x, 1.0)

    lat_atoms = jnp.repeat(lattice, num_atoms, axis=0, total_repeat_length=n)
    inv_atoms = jnp.repeat(jnp.linalg.pinv(lattice), num_atoms, axis=0,
                           total_repeat_length=n)
    cart_noisy = jnp.einsum('bi,bij->bj', frac_noisy, lat_atoms)
    cart_p = jnp.einsum('bi,bij->bj', frac_x0, lat_atoms)

    unit_cell = jnp.asarray(_SUPERCELLS, dtype=jnp.float32).T               # (3, 27)
    pbc_offsets = jnp.einsum('bij,ic->bjc', lattice, unit_cell)             # (B, 3, 27)
    offs = jnp.repeat(pbc_offsets, num_atoms, axis=0, total_repeat_length=n)
    dvec = cart_noisy[:, :, None] - (cart_p[:, :, None] + offs)             # (N, 3, 27)
    dsqr = jnp.sum(dvec ** 2, axis=1)                                       # (N, 27)
    idx = jnp.argmin(dsqr, axis=-1)
    min_vec = jnp.take_along_axis(dvec, idx[:, None, None], axis=2)[..., 0]  # (N, 3)
    wrapped = jnp.mod(jnp.einsum('bi,bij->bj', min_vec, inv_atoms), 1.0)
    return frac_noisy, wrapped, used_sigmas


def _circ_close(a, b, tol=1e-4):
    """allclose on the torus [0,1): values just below 1 ~ values just above 0."""
    d = jnp.abs(a - b)
    d = jnp.minimum(d, 1.0 - d)
    return bool(jnp.all(d <= tol))


def _run_case(key, sigmas, num_steps, num_atoms):
    batch = num_atoms.shape[0]
    n = int(num_atoms.sum())
    k_x, k_t, k_lat, k_eps = jax.random.split(key, 4)
    frac_x0 = jax.random.uniform(k_x, (n, 3), dtype=jnp.float32)
    t_struct = jax.random.randint(k_t, (batch,), 1, num_steps + 1, dtype=jnp.int32)
    t = jnp.repeat(t_struct, num_atoms, total_repeat_length=n)              # per-atom t
    # well-conditioned random lattices (diag-dominant)
    lattice = (jnp.eye(3, dtype=jnp.float32)[None] * 4.0
               + 0.5 * jax.random.normal(k_lat, (batch, 3, 3), dtype=jnp.float32))
    eps_raw = jax.random.normal(k_eps, (n, 3), dtype=jnp.float32)

    out = ve_pbc_forward(sigmas, frac_x0, t, lattice, num_atoms, eps_raw)
    jax.block_until_ready(out)
    frac_noisy, wrapped_eps, used_sigmas = out

    fn_ref, wr_ref, us_ref = _ref_forward(sigmas, frac_x0, t, lattice, num_atoms, eps_raw)

    assert frac_noisy.shape == (n, 3)
    assert wrapped_eps.shape == (n, 3)
    assert used_sigmas.shape == (n, 1)
    assert _circ_close(frac_noisy, fn_ref)
    assert _circ_close(wrapped_eps, wr_ref)
    assert jnp.allclose(used_sigmas, us_ref, atol=1e-6, rtol=1e-6)


if __name__ == "__main__":
    num_steps, sigma_min, sigma_max = 1000, 0.005, 0.5
    sigmas = make_ve_sigmas(num_steps, sigma_min, sigma_max)

    key = jax.random.PRNGKey(0)
    k1, k2 = jax.random.split(key)

    # Small deterministic example: 2 structures, 5 + 3 atoms (single grid step).
    _run_case(k1, sigmas, num_steps, jnp.array([5, 3], dtype=jnp.int32))
    # Slightly larger case exercising the >=2-grid-step path (megacore split).
    _run_case(k2, sigmas, num_steps, jnp.array([700, 512, 300], dtype=jnp.int32))

    print("KERNEL_OK")
</pallas_src>

<mosaic_0001>
module attributes {stable_mosaic.version = 11 : i64} {
  func.func @_ve_pbc_fwd_kernel(%arg0: i32, %arg1: memref<3x8x128xf32, #tpu.memory_space<vmem>>, %arg2: memref<3x8x128xf32, #tpu.memory_space<vmem>>, %arg3: memref<1x8x128xf32, #tpu.memory_space<vmem>>, %arg4: memref<9x8x128xf32, #tpu.memory_space<vmem>>, %arg5: memref<3x8x128xf32, #tpu.memory_space<vmem>>, %arg6: memref<3x8x128xf32, #tpu.memory_space<vmem>>) attributes {dimension_semantics = [#tpu.dimension_semantics<parallel>], iteration_bounds = array<i64: 1>, scalar_prefetch = 0 : i64, scratch_operands = 0 : i64, tpu.core_type = #tpu.core_type<tc>, window_params = [{transform_indices = @transform_0, window_bounds = array<i64: 3, 8, 128>}, {transform_indices = @transform_1, window_bounds = array<i64: 3, 8, 128>}, {transform_indices = @transform_2, window_bounds = array<i64: 1, 8, 128>}, {transform_indices = @transform_3, window_bounds = array<i64: 9, 8, 128>}, {transform_indices = @transform_4, window_bounds = array<i64: 3, 8, 128>}, {transform_indices = @transform_5, window_bounds = array<i64: 3, 8, 128>}]} {
    %c0 = arith.constant 0 : index
    %c0_0 = arith.constant 0 : index
    %c0_1 = arith.constant 0 : index
    %0 = vector.load %arg3[%c0, %c0_0, %c0_1] : memref<1x8x128xf32, #tpu.memory_space<vmem>>, vector<1x8x128xf32>
    %1 = vector.shape_cast %0 : vector<1x8x128xf32> to vector<8x128xf32>
    %c0_2 = arith.constant 0 : index
    %c0_3 = arith.constant 0 : index
    %c0_4 = arith.constant 0 : index
    %2 = vector.load %arg1[%c0_2, %c0_3, %c0_4] : memref<3x8x128xf32, #tpu.memory_space<vmem>>, vector<1x8x128xf32>
    %3 = vector.shape_cast %2 : vector<1x8x128xf32> to vector<8x128xf32>
    %c1 = arith.constant 1 : index
    %c0_5 = arith.constant 0 : index
    %c0_6 = arith.constant 0 : index
    %4 = vector.load %arg1[%c1, %c0_5, %c0_6] : memref<3x8x128xf32, #tpu.memory_space<vmem>>, vector<1x8x128xf32>
    %5 = vector.shape_cast %4 : vector<1x8x128xf32> to vector<8x128xf32>
    %c2 = arith.constant 2 : index
    %c0_7 = arith.constant 0 : index
    %c0_8 = arith.constant 0 : index
    %6 = vector.load %arg1[%c2, %c0_7, %c0_8] : memref<3x8x128xf32, #tpu.memory_space<vmem>>, vector<1x8x128xf32>
    %7 = vector.shape_cast %6 : vector<1x8x128xf32> to vector<8x128xf32>
    %c0_9 = arith.constant 0 : index
    %c0_10 = arith.constant 0 : index
    %c0_11 = arith.constant 0 : index
    %8 = vector.load %arg2[%c0_9, %c0_10, %c0_11] : memref<3x8x128xf32, #tpu.memory_space<vmem>>, vector<1x8x128xf32>
    %9 = vector.shape_cast %8 : vector<1x8x128xf32> to vector<8x128xf32>
    %10 = arith.mulf %9, %1 : vector<8x128xf32>
    %11 = arith.addf %3, %10 : vector<8x128xf32>
    %12 = math.floor %11 : vector<8x128xf32>
    %13 = arith.subf %11, %12 : vector<8x128xf32>
    %c0_12 = arith.constant 0 : index
    %c0_13 = arith.constant 0 : index
    %c0_14 = arith.constant 0 : index
    %14 = vector.load %arg5[%c0_12, %c0_13, %c0_14] : memref<3x8x128xf32, #tpu.memory_space<vmem>>, vector<1x8x128xf32>
    %15 = vector.shape_cast %14 : vector<1x8x128xf32> to vector<8x128xf32>
    %16 = vector.shape_cast %13 : vector<8x128xf32> to vector<1x8x128xf32>
    tpu.vector_store %arg5[%c0_12, %c0_13, %c0_14], %16 {strides = array<i32>} : memref<3x8x128xf32, #tpu.memory_space<vmem>>, vector<1x8x128xf32>,
    %c1_15 = arith.constant 1 : index
    %c0_16 = arith.constant 0 : index
    %c0_17 = arith.constant 0 : index
    %17 = vector.load %arg2[%c1_15, %c0_16, %c0_17] : memref<3x8x128xf32, #tpu.memory_space<vmem>>, vector<1x8x128xf32>
    %18 = vector.shape_cast %17 : vector<1x8x128xf32> to vector<8x128xf32>
    %19 = arith.mulf %18, %1 : vector<8x128xf32>
    %20 = arith.addf %5, %19 : vector<8x128xf32>
    %21 = math.floor %20 : vector<8x128xf32>
    %22 = arith.subf %20, %21 : vector<8x128xf32>
    %c1_18 = arith.constant 1 : index
    %c0_19 = arith.constant 0 : index
    %c0_20 = arith.constant 0 : index
    %23 = vector.load %arg5[%c1_18, %c0_19, %c0_20] : memref<3x8x128xf32, #tpu.memory_space<vmem>>, vector<1x8x128xf32>
    %24 = vector.shape_cast %23 : vector<1x8x128xf32> to vector<8x128xf32>
    %25 = vector.shape_cast %22 : vector<8x128xf32> to vector<1x8x128xf32>
    tpu.vector_store %arg5[%c1_18, %c0_19, %c0_20], %25 {strides = array<i32>} : memref<3x8x128xf32, #tpu.memory_space<vmem>>, vector<1x8x128xf32>,
    %c2_21 = arith.constant 2 : index
    %c0_22 = arith.constant 0 : index
    %c0_23 = arith.constant 0 : index
    %26 = vector.load %arg2[%c2_21, %c0_22, %c0_23] : memref<3x8x128xf32, #tpu.memory_space<vmem>>, vector<1x8x128xf32>
    %27 = vector.shape_cast %26 : vector<1x8x128xf32> to vector<8x128xf32>
    %28 = arith.mulf %27, %1 : vector<8x128xf32>
    %29 = arith.addf %7, %28 : vector<8x128xf32>
    %30 = math.floor %29 : vector<8x128xf32>
    %31 = arith.subf %29, %30 : vector<8x128xf32>
    %c2_24 = arith.constant 2 : index
    %c0_25 = arith.constant 0 : index
    %c0_26 = arith.constant 0 : index
    %32 = vector.load %arg5[%c2_24, %c0_25, %c0_26] : memref<3x8x128xf32, #tpu.memory_space<vmem>>, vector<1x8x128xf32>
    %33 = vector.shape_cast %32 : vector<1x8x128xf32> to vector<8x128xf32>
    %34 = vector.shape_cast %31 : vector<8x128xf32> to vector<1x8x128xf32>
    tpu.vector_store %arg5[%c2_24, %c0_25, %c0_26], %34 {strides = array<i32>} : memref<3x8x128xf32, #tpu.memory_space<vmem>>, vector<1x8x128xf32>,
    %c0_27 = arith.constant 0 : index
    %c0_28 = arith.constant 0 : index
    %c0_29 = arith.constant 0 : index
    %35 = vector.load %arg4[%c0_27, %c0_28, %c0_29] : memref<9x8x128xf32, #tpu.memory_space<vmem>>, vector<1x8x128xf32>
    %36 = vector.shape_cast %35 : vector<1x8x128xf32> to vector<8x128xf32>
    %c1_30 = arith.constant 1 : index
    %c0_31 = arith.constant 0 : index
    %c0_32 = arith.constant 0 : index
    %37 = vector.load %arg4[%c1_30, %c0_31, %c0_32] : memref<9x8x128xf32, #tpu.memory_space<vmem>>, vector<1x8x128xf32>
    %38 = vector.shape_cast %37 : vector<1x8x128xf32> to vector<8x128xf32>
    %c2_33 = arith.constant 2 : index
    %c0_34 = arith.constant 0 : index
    %c0_35 = arith.constant 0 : index
    %39 = vector.load %arg4[%c2_33, %c0_34, %c0_35] : memref<9x8x128xf32, #tpu.memory_space<vmem>>, vector<1x8x128xf32>
    %40 = vector.shape_cast %39 : vector<1x8x128xf32> to vector<8x128xf32>
    %c3 = arith.constant 3 : index
    %c0_36 = arith.constant 0 : index
    %c0_37 = arith.constant 0 : index
    %41 = vector.load %arg4[%c3, %c0_36, %c0_37] : memref<9x8x128xf32, #tpu.memory_space<vmem>>, vector<1x8x128xf32>
    %42 = vector.shape_cast %41 : vector<1x8x128xf32> to vector<8x128xf32>
    %c4 = arith.constant 4 : index
    %c0_38 = arith.constant 0 : index
    %c0_39 = arith.constant 0 : index
    %43 = vector.load %arg4[%c4, %c0_38, %c0_39] : memref<9x8x128xf32, #tpu.memory_space<vmem>>, vector<1x8x128xf32>
    %44 = vector.shape_cast %43 : vector<1x8x128xf32> to vector<8x128xf32>
    %c5 = arith.constant 5 : index
    %c0_40 = arith.constant 0 : index
    %c0_41 = arith.constant 0 : index
    %45 = vector.load %arg4[%c5, %c0_40, %c0_41] : memref<9x8x128xf32, #tpu.memory_space<vmem>>, vector<1x8x128xf32>
    %46 = vector.shape_cast %45 : vector<1x8x128xf32> to vector<8x128xf32>
    %c6 = arith.constant 6 : index
    %c0_42 = arith.constant 0 : index
    %c0_43 = arith.constant 0 : index
    %47 = vector.load %arg4[%c6, %c0_42, %c0_43] : memref<9x8x128xf32, #tpu.memory_space<vmem>>, vector<1x8x128xf32>
    %48 = vector.shape_cast %47 : vector<1x8x128xf32> to vector<8x128xf32>
    %c7 = arith.constant 7 : index
    %c0_44 = arith.constant 0 : index
    %c0_45 = arith.constant 0 : index
    %49 = vector.load %arg4[%c7, %c0_44, %c0_45] : memref<9x8x128xf32, #tpu.memory_space<vmem>>, vector<1x8x128xf32>
    %50 = vector.shape_cast %49 : vector<1x8x128xf32> to vector<8x128xf32>
    %c8 = arith.constant 8 : index
    %c0_46 = arith.constant 0 : index
    %c0_47 = arith.constant 0 : index
    %51 = vector.load %arg4[%c8, %c0_46, %c0_47] : memref<9x8x128xf32, #tpu.memory_space<vmem>>, vector<1x8x128xf32>
    %52 = vector.shape_cast %51 : vector<1x8x128xf32> to vector<8x128xf32>
    %53 = arith.subf %13, %3 : vector<8x128xf32>
    %54 = arith.subf %22, %5 : vector<8x128xf32>
    %55 = arith.subf %31, %7 : vector<8x128xf32>
    %56 = arith.mulf %53, %36 : vector<8x128xf32>
    %57 = arith.mulf %54, %42 : vector<8x128xf32>
    %58 = arith.addf %56, %57 : vector<8x128xf32>
    %59 = arith.mulf %55, %48 : vector<8x128xf32>
    %60 = arith.addf %58, %59 : vector<8x128xf32>
    %61 = arith.mulf %53, %38 : vector<8x128xf32>
    %62 = arith.mulf %54, %44 : vector<8x128xf32>
    %63 = arith.addf %61, %62 : vector<8x128xf32>
    %64 = arith.mulf %55, %50 : vector<8x128xf32>
    %65 = arith.addf %63, %64 : vector<8x128xf32>
    %66 = arith.mulf %53, %40 : vector<8x128xf32>
    %67 = arith.mulf %54, %46 : vector<8x128xf32>
    %68 = arith.addf %66, %67 : vector<8x128xf32>
    %69 = arith.mulf %55, %52 : vector<8x128xf32>
    %70 = arith.addf %68, %69 : vector<8x128xf32>
    %71 = arith.mulf %60, %36 : vector<8x128xf32>
    %72 = arith.mulf %65, %38 : vector<8x128xf32>
    %73 = arith.addf %71, %72 : vector<8x128xf32>
    %74 = arith.mulf %70, %40 : vector<8x128xf32>
    %75 = arith.addf %73, %74 : vector<8x128xf32>
    %76 = arith.mulf %60, %42 : vector<8x128xf32>
    %77 = arith.mulf %65, %44 : vector<8x128xf32>
    %78 = arith.addf %76, %77 : vector<8x128xf32>
    %79 = arith.mulf %70, %46 : vector<8x128xf32>
    %80 = arith.addf %78, %79 : vector<8x128xf32>
    %81 = arith.mulf %60, %48 : vector<8x128xf32>
    %82 = arith.mulf %65, %50 : vector<8x128xf32>
    %83 = arith.addf %81, %82 : vector<8x128xf32>
    %84 = arith.mulf %70, %52 : vector<8x128xf32>
    %85 = arith.addf %83, %84 : vector<8x128xf32>
    %86 = arith.mulf %60, %60 : vector<8x128xf32>
    %87 = arith.mulf %65, %65 : vector<8x128xf32>
    %88 = arith.addf %86, %87 : vector<8x128xf32>
    %89 = arith.mulf %70, %70 : vector<8x128xf32>
    %90 = arith.addf %88, %89 : vector<8x128xf32>
    %91 = arith.mulf %36, %36 : vector<8x128xf32>
    %92 = arith.mulf %38, %38 : vector<8x128xf32>
    %93 = arith.addf %91, %92 : vector<8x128xf32>
    %94 = arith.mulf %40, %40 : vector<8x128xf32>
    %95 = arith.addf %93, %94 : vector<8x128xf32>
    %96 = arith.mulf %36, %42 : vector<8x128xf32>
    %97 = arith.mulf %38, %44 : vector<8x128xf32>
    %98 = arith.addf %96, %97 : vector<8x128xf32>
    %99 = arith.mulf %40, %46 : vector<8x128xf32>
    %100 = arith.addf %98, %99 : vector<8x128xf32>
    %101 = arith.mulf %36, %48 : vector<8x128xf32>
    %102 = arith.mulf %38, %50 : vector<8x128xf32>
    %103 = arith.addf %101, %102 : vector<8x128xf32>
    %104 = arith.mulf %40, %52 : vector<8x128xf32>
    %105 = arith.addf %103, %104 : vector<8x128xf32>
    %106 = arith.mulf %42, %42 : vector<8x128xf32>
    %107 = arith.mulf %44, %44 : vector<8x128xf32>
    %108 = arith.addf %106, %107 : vector<8x128xf32>
    %109 = arith.mulf %46, %46 : vector<8x128xf32>
    %110 = arith.addf %108, %109 : vector<8x128xf32>
    %111 = arith.mulf %42, %48 : vector<8x128xf32>
    %112 = arith.mulf %44, %50 : vector<8x128xf32>
    %113 = arith.addf %111, %112 : vector<8x128xf32>
    %114 = arith.mulf %46, %52 : vector<8x128xf32>
    %115 = arith.addf %113, %114 : vector<8x128xf32>
    %116 = arith.mulf %48, %48 : vector<8x128xf32>
    %117 = arith.mulf %50, %50 : vector<8x128xf32>
    %118 = arith.addf %116, %117 : vector<8x128xf32>
    %119 = arith.mulf %52, %52 : vector<8x128xf32>
    %120 = arith.addf %118, %119 : vector<8x128xf32>
    %121 = arith.addf %100, %100 : vector<8x128xf32>
    %122 = arith.addf %105, %105 : vector<8x128xf32>
    %123 = arith.addf %115, %115 : vector<8x128xf32>
    %cst = arith.constant 0.000000e+00 : f32
    %124 = vector.broadcast %cst : f32 to vector<8x128xf32>
    %125 = arith.addf %90, %120 : vector<8x128xf32>
    %126 = arith.addf %85, %85 : vector<8x128xf32>
    %127 = arith.subf %125, %126 : vector<8x128xf32>
    %128 = arith.addf %125, %126 : vector<8x128xf32>
    %129 = arith.cmpf olt, %127, %90 : vector<8x128xf32>
    %130 = arith.minimumf %127, %90 : vector<8x128xf32>
    %cst_48 = arith.constant 0.000000e+00 : f32
    %131 = vector.broadcast %cst_48 : f32 to vector<8x128xf32>
    %132 = arith.select %129, %131, %124 : vector<8x128xi1>, vector<8x128xf32>
    %cst_49 = arith.constant 0.000000e+00 : f32
    %133 = vector.broadcast %cst_49 : f32 to vector<8x128xf32>
    %134 = arith.select %129, %133, %124 : vector<8x128xi1>, vector<8x128xf32>
    %cst_50 = arith.constant 1.000000e+00 : f32
    %135 = vector.broadcast %cst_50 : f32 to vector<8x128xf32>
    %136 = arith.select %129, %135, %124 : vector<8x128xi1>, vector<8x128xf32>
    %137 = arith.cmpf olt, %128, %130 : vector<8x128xf32>
    %138 = arith.minimumf %128, %130 : vector<8x128xf32>
    %cst_51 = arith.constant 0.000000e+00 : f32
    %139 = vector.broadcast %cst_51 : f32 to vector<8x128xf32>
    %140 = arith.select %137, %139, %132 : vector<8x128xi1>, vector<8x128xf32>
    %cst_52 = arith.constant 0.000000e+00 : f32
    %141 = vector.broadcast %cst_52 : f32 to vector<8x128xf32>
    %142 = arith.select %137, %141, %134 : vector<8x128xi1>, vector<8x128xf32>
    %cst_53 = arith.constant -1.000000e+00 : f32
    %143 = vector.broadcast %cst_53 : f32 to vector<8x128xf32>
    %144 = arith.select %137, %143, %136 : vector<8x128xi1>, vector<8x128xf32>
    %cst_54 = arith.constant 0.000000e+00 : f32
    %145 = vector.broadcast %cst_54 : f32 to vector<8x128xf32>
    %146 = arith.subf %145, %85 : vector<8x128xf32>
    %147 = arith.addf %80, %146 : vector<8x128xf32>
    %148 = arith.addf %110, %120 : vector<8x128xf32>
    %149 = arith.subf %148, %123 : vector<8x128xf32>
    %150 = arith.addf %90, %149 : vector<8x128xf32>
    %151 = arith.addf %147, %147 : vector<8x128xf32>
    %152 = arith.subf %150, %151 : vector<8x128xf32>
    %153 = arith.addf %150, %151 : vector<8x128xf32>
    %154 = arith.cmpf olt, %152, %138 : vector<8x128xf32>
    %155 = arith.minimumf %152, %138 : vector<8x128xf32>
    %cst_55 = arith.constant 0.000000e+00 : f32
    %156 = vector.broadcast %cst_55 : f32 to vector<8x128xf32>
    %157 = arith.select %154, %156, %140 : vector<8x128xi1>, vector<8x128xf32>
    %cst_56 = arith.constant 1.000000e+00 : f32
    %158 = vector.broadcast %cst_56 : f32 to vector<8x128xf32>
    %159 = arith.select %154, %158, %142 : vector<8x128xi1>, vector<8x128xf32>
    %cst_57 = arith.constant -1.000000e+00 : f32
    %160 = vector.broadcast %cst_57 : f32 to vector<8x128xf32>
    %161 = arith.select %154, %160, %144 : vector<8x128xi1>, vector<8x128xf32>
    %162 = arith.cmpf olt, %153, %155 : vector<8x128xf32>
    %163 = arith.minimumf %153, %155 : vector<8x128xf32>
    %cst_58 = arith.constant 0.000000e+00 : f32
    %164 = vector.broadcast %cst_58 : f32 to vector<8x128xf32>
    %165 = arith.select %162, %164, %157 : vector<8x128xi1>, vector<8x128xf32>
    %cst_59 = arith.constant -1.000000e+00 : f32
    %166 = vector.broadcast %cst_59 : f32 to vector<8x128xf32>
    %167 = arith.select %162, %166, %159 : vector<8x128xi1>, vector<8x128xf32>
    %cst_60 = arith.constant 1.000000e+00 : f32
    %168 = vector.broadcast %cst_60 : f32 to vector<8x128xf32>
    %169 = arith.select %162, %168, %161 : vector<8x128xi1>, vector<8x128xf32>
    %170 = arith.addf %90, %110 : vector<8x128xf32>
    %171 = arith.addf %80, %80 : vector<8x128xf32>
    %172 = arith.subf %170, %171 : vector<8x128xf32>
    %173 = arith.addf %170, %171 : vector<8x128xf32>
    %174 = arith.cmpf olt, %172, %163 : vector<8x128xf32>
    %175 = arith.minimumf %172, %163 : vector<8x128xf32>
    %cst_61 = arith.constant 0.000000e+00 : f32
    %176 = vector.broadcast %cst_61 : f32 to vector<8x128xf32>
    %177 = arith.select %174, %176, %165 : vector<8x128xi1>, vector<8x128xf32>
    %cst_62 = arith.constant 1.000000e+00 : f32
    %178 = vector.broadcast %cst_62 : f32 to vector<8x128xf32>
    %179 = arith.select %174, %178, %167 : vector<8x128xi1>, vector<8x128xf32>
    %cst_63 = arith.constant 0.000000e+00 : f32
    %180 = vector.broadcast %cst_63 : f32 to vector<8x128xf32>
    %181 = arith.select %174, %180, %169 : vector<8x128xi1>, vector<8x128xf32>
    %182 = arith.cmpf olt, %173, %175 : vector<8x128xf32>
    %183 = arith.minimumf %173, %175 : vector<8x128xf32>
    %cst_64 = arith.constant 0.000000e+00 : f32
    %184 = vector.broadcast %cst_64 : f32 to vector<8x128xf32>
    %185 = arith.select %182, %184, %177 : vector<8x128xi1>, vector<8x128xf32>
    %cst_65 = arith.constant -1.000000e+00 : f32
    %186 = vector.broadcast %cst_65 : f32 to vector<8x128xf32>
    %187 = arith.select %182, %186, %179 : vector<8x128xi1>, vector<8x128xf32>
    %cst_66 = arith.constant 0.000000e+00 : f32
    %188 = vector.broadcast %cst_66 : f32 to vector<8x128xf32>
    %189 = arith.select %182, %188, %181 : vector<8x128xi1>, vector<8x128xf32>
    %190 = arith.addf %80, %85 : vector<8x128xf32>
    %191 = arith.addf %110, %120 : vector<8x128xf32>
    %192 = arith.addf %191, %123 : vector<8x128xf32>
    %193 = arith.addf %90, %192 : vector<8x128xf32>
    %194 = arith.addf %190, %190 : vector<8x128xf32>
    %195 = arith.subf %193, %194 : vector<8x128xf32>
    %196 = arith.addf %193, %194 : vector<8x128xf32>
    %197 = arith.cmpf olt, %195, %183 : vector<8x128xf32>
    %198 = arith.minimumf %195, %183 : vector<8x128xf32>
    %cst_67 = arith.constant 0.000000e+00 : f32
    %199 = vector.broadcast %cst_67 : f32 to vector<8x128xf32>
    %200 = arith.select %197, %199, %185 : vector<8x128xi1>, vector<8x128xf32>
    %cst_68 = arith.constant 1.000000e+00 : f32
    %201 = vector.broadcast %cst_68 : f32 to vector<8x128xf32>
    %202 = arith.select %197, %201, %187 : vector<8x128xi1>, vector<8x128xf32>
    %cst_69 = arith.constant 1.000000e+00 : f32
    %203 = vector.broadcast %cst_69 : f32 to vector<8x128xf32>
    %204 = arith.select %197, %203, %189 : vector<8x128xi1>, vector<8x128xf32>
    %205 = arith.cmpf olt, %196, %198 : vector<8x128xf32>
    %206 = arith.minimumf %196, %198 : vector<8x128xf32>
    %cst_70 = arith.constant 0.000000e+00 : f32
    %207 = vector.broadcast %cst_70 : f32 to vector<8x128xf32>
    %208 = arith.select %205, %207, %200 : vector<8x128xi1>, vector<8x128xf32>
    %cst_71 = arith.constant -1.000000e+00 : f32
    %209 = vector.broadcast %cst_71 : f32 to vector<8x128xf32>
    %210 = arith.select %205, %209, %202 : vector<8x128xi1>, vector<8x128xf32>
    %cst_72 = arith.constant -1.000000e+00 : f32
    %211 = vector.broadcast %cst_72 : f32 to vector<8x128xf32>
    %212 = arith.select %205, %211, %204 : vector<8x128xi1>, vector<8x128xf32>
    %cst_73 = arith.constant 0.000000e+00 : f32
    %213 = vector.broadcast %cst_73 : f32 to vector<8x128xf32>
    %214 = arith.subf %213, %80 : vector<8x128xf32>
    %215 = arith.addf %75, %214 : vector<8x128xf32>
    %216 = arith.addf %95, %110 : vector<8x128xf32>
    %cst_74 = arith.constant 0.000000e+00 : f32
    %217 = vector.broadcast %cst_74 : f32 to vector<8x128xf32>
    %218 = arith.subf %217, %85 : vector<8x128xf32>
    %219 = arith.addf %215, %218 : vector<8x128xf32>
    %220 = arith.addf %216, %120 : vector<8x128xf32>
    %221 = arith.subf %220, %121 : vector<8x128xf32>
    %222 = arith.subf %221, %122 : vector<8x128xf32>
    %223 = arith.addf %222, %123 : vector<8x128xf32>
    %224 = arith.addf %90, %223 : vector<8x128xf32>
    %225 = arith.addf %219, %219 : vector<8x128xf32>
    %226 = arith.subf %224, %225 : vector<8x128xf32>
    %227 = arith.addf %224, %225 : vector<8x128xf32>
    %228 = arith.cmpf olt, %226, %206 : vector<8x128xf32>
    %229 = arith.minimumf %226, %206 : vector<8x128xf32>
    %cst_75 = arith.constant 1.000000e+00 : f32
    %230 = vector.broadcast %cst_75 : f32 to vector<8x128xf32>
    %231 = arith.select %228, %230, %208 : vector<8x128xi1>, vector<8x128xf32>
    %cst_76 = arith.constant -1.000000e+00 : f32
    %232 = vector.broadcast %cst_76 : f32 to vector<8x128xf32>
    %233 = arith.select %228, %232, %210 : vector<8x128xi1>, vector<8x128xf32>
    %cst_77 = arith.constant -1.000000e+00 : f32
    %234 = vector.broadcast %cst_77 : f32 to vector<8x128xf32>
    %235 = arith.select %228, %234, %212 : vector<8x128xi1>, vector<8x128xf32>
    %236 = arith.cmpf olt, %227, %229 : vector<8x128xf32>
    %237 = arith.minimumf %227, %229 : vector<8x128xf32>
    %cst_78 = arith.constant -1.000000e+00 : f32
    %238 = vector.broadcast %cst_78 : f32 to vector<8x128xf32>
    %239 = arith.select %236, %238, %231 : vector<8x128xi1>, vector<8x128xf32>
    %cst_79 = arith.constant 1.000000e+00 : f32
    %240 = vector.broadcast %cst_79 : f32 to vector<8x128xf32>
    %241 = arith.select %236, %240, %233 : vector<8x128xi1>, vector<8x128xf32>
    %cst_80 = arith.constant 1.000000e+00 : f32
    %242 = vector.broadcast %cst_80 : f32 to vector<8x128xf32>
    %243 = arith.select %236, %242, %235 : vector<8x128xi1>, vector<8x128xf32>
    %cst_81 = arith.constant 0.000000e+00 : f32
    %244 = vector.broadcast %cst_81 : f32 to vector<8x128xf32>
    %245 = arith.subf %244, %80 : vector<8x128xf32>
    %246 = arith.addf %75, %245 : vector<8x128xf32>
    %247 = arith.addf %95, %110 : vector<8x128xf32>
    %248 = arith.subf %247, %121 : vector<8x128xf32>
    %249 = arith.addf %90, %248 : vector<8x128xf32>
    %250 = arith.addf %246, %246 : vector<8x128xf32>
    %251 = arith.subf %249, %250 : vector<8x128xf32>
    %252 = arith.addf %249, %250 : vector<8x128xf32>
    %253 = arith.cmpf olt, %251, %237 : vector<8x128xf32>
    %254 = arith.minimumf %251, %237 : vector<8x128xf32>
    %cst_82 = arith.constant 1.000000e+00 : f32
    %255 = vector.broadcast %cst_82 : f32 to vector<8x128xf32>
    %256 = arith.select %253, %255, %239 : vector<8x128xi1>, vector<8x128xf32>
    %cst_83 = arith.constant -1.000000e+00 : f32
    %257 = vector.broadcast %cst_83 : f32 to vector<8x128xf32>
    %258 = arith.select %253, %257, %241 : vector<8x128xi1>, vector<8x128xf32>
    %cst_84 = arith.constant 0.000000e+00 : f32
    %259 = vector.broadcast %cst_84 : f32 to vector<8x128xf32>
    %260 = arith.select %253, %259, %243 : vector<8x128xi1>, vector<8x128xf32>
    %261 = arith.cmpf olt, %252, %254 : vector<8x128xf32>
    %262 = arith.minimumf %252, %254 : vector<8x128xf32>
    %cst_85 = arith.constant -1.000000e+00 : f32
    %263 = vector.broadcast %cst_85 : f32 to vector<8x128xf32>
    %264 = arith.select %261, %263, %256 : vector<8x128xi1>, vector<8x128xf32>
    %cst_86 = arith.constant 1.000000e+00 : f32
    %265 = vector.broadcast %cst_86 : f32 to vector<8x128xf32>
    %266 = arith.select %261, %265, %258 : vector<8x128xi1>, vector<8x128xf32>
    %cst_87 = arith.constant 0.000000e+00 : f32
    %267 = vector.broadcast %cst_87 : f32 to vector<8x128xf32>
    %268 = arith.select %261, %267, %260 : vector<8x128xi1>, vector<8x128xf32>
    %cst_88 = arith.constant 0.000000e+00 : f32
    %269 = vector.broadcast %cst_88 : f32 to vector<8x128xf32>
    %270 = arith.subf %269, %80 : vector<8x128xf32>
    %271 = arith.addf %75, %270 : vector<8x128xf32>
    %272 = arith.addf %95, %110 : vector<8x128xf32>
    %273 = arith.addf %271, %85 : vector<8x128xf32>
    %274 = arith.addf %272, %120 : vector<8x128xf32>
    %275 = arith.subf %274, %121 : vector<8x128xf32>
    %276 = arith.addf %275, %122 : vector<8x128xf32>
    %277 = arith.subf %276, %123 : vector<8x128xf32>
    %278 = arith.addf %90, %277 : vector<8x128xf32>
    %279 = arith.addf %273, %273 : vector<8x128xf32>
    %280 = arith.subf %278, %279 : vector<8x128xf32>
    %281 = arith.addf %278, %279 : vector<8x128xf32>
    %282 = arith.cmpf olt, %280, %262 : vector<8x128xf32>
    %283 = arith.minimumf %280, %262 : vector<8x128xf32>
    %cst_89 = arith.constant 1.000000e+00 : f32
    %284 = vector.broadcast %cst_89 : f32 to vector<8x128xf32>
    %285 = arith.select %282, %284, %264 : vector<8x128xi1>, vector<8x128xf32>
    %cst_90 = arith.constant -1.000000e+00 : f32
    %286 = vector.broadcast %cst_90 : f32 to vector<8x128xf32>
    %287 = arith.select %282, %286, %266 : vector<8x128xi1>, vector<8x128xf32>
    %cst_91 = arith.constant 1.000000e+00 : f32
    %288 = vector.broadcast %cst_91 : f32 to vector<8x128xf32>
    %289 = arith.select %282, %288, %268 : vector<8x128xi1>, vector<8x128xf32>
    %290 = arith.cmpf olt, %281, %283 : vector<8x128xf32>
    %291 = arith.minimumf %281, %283 : vector<8x128xf32>
    %cst_92 = arith.constant -1.000000e+00 : f32
    %292 = vector.broadcast %cst_92 : f32 to vector<8x128xf32>
    %293 = arith.select %290, %292, %285 : vector<8x128xi1>, vector<8x128xf32>
    %cst_93 = arith.constant 1.000000e+00 : f32
    %294 = vector.broadcast %cst_93 : f32 to vector<8x128xf32>
    %295 = arith.select %290, %294, %287 : vector<8x128xi1>, vector<8x128xf32>
    %cst_94 = arith.constant -1.000000e+00 : f32
    %296 = vector.broadcast %cst_94 : f32 to vector<8x128xf32>
    %297 = arith.select %290, %296, %289 : vector<8x128xi1>, vector<8x128xf32>
    %cst_95 = arith.constant 0.000000e+00 : f32
    %298 = vector.broadcast %cst_95 : f32 to vector<8x128xf32>
    %299 = arith.subf %298, %85 : vector<8x128xf32>
    %300 = arith.addf %75, %299 : vector<8x128xf32>
    %301 = arith.addf %95, %120 : vector<8x128xf32>
    %302 = arith.subf %301, %122 : vector<8x128xf32>
    %303 = arith.addf %90, %302 : vector<8x128xf32>
    %304 = arith.addf %300, %300 : vector<8x128xf32>
    %305 = arith.subf %303, %304 : vector<8x128xf32>
    %306 = arith.addf %303, %304 : vector<8x128xf32>
    %307 = arith.cmpf olt, %305, %291 : vector<8x128xf32>
    %308 = arith.minimumf %305, %291 : vector<8x128xf32>
    %cst_96 = arith.constant 1.000000e+00 : f32
    %309 = vector.broadcast %cst_96 : f32 to vector<8x128xf32>
    %310 = arith.select %307, %309, %293 : vector<8x128xi1>, vector<8x128xf32>
    %cst_97 = arith.constant 0.000000e+00 : f32
    %311 = vector.broadcast %cst_97 : f32 to vector<8x128xf32>
    %312 = arith.select %307, %311, %295 : vector<8x128xi1>, vector<8x128xf32>
    %cst_98 = arith.constant -1.000000e+00 : f32
    %313 = vector.broadcast %cst_98 : f32 to vector<8x128xf32>
    %314 = arith.select %307, %313, %297 : vector<8x128xi1>, vector<8x128xf32>
    %315 = arith.cmpf olt, %306, %308 : vector<8x128xf32>
    %316 = arith.minimumf %306, %308 : vector<8x128xf32>
    %cst_99 = arith.constant -1.000000e+00 : f32
    %317 = vector.broadcast %cst_99 : f32 to vector<8x128xf32>
    %318 = arith.select %315, %317, %310 : vector<8x128xi1>, vector<8x128xf32>
    %cst_100 = arith.constant 0.000000e+00 : f32
    %319 = vector.broadcast %cst_100 : f32 to vector<8x128xf32>
    %320 = arith.select %315, %319, %312 : vector<8x128xi1>, vector<8x128xf32>
    %cst_101 = arith.constant 1.000000e+00 : f32
    %321 = vector.broadcast %cst_101 : f32 to vector<8x128xf32>
    %322 = arith.select %315, %321, %314 : vector<8x128xi1>, vector<8x128xf32>
    %323 = arith.addf %90, %95 : vector<8x128xf32>
    %324 = arith.addf %75, %75 : vector<8x128xf32>
    %325 = arith.subf %323, %324 : vector<8x128xf32>
    %326 = arith.addf %323, %324 : vector<8x128xf32>
    %327 = arith.cmpf olt, %325, %316 : vector<8x128xf32>
    %328 = arith.minimumf %325, %316 : vector<8x128xf32>
    %cst_102 = arith.constant 1.000000e+00 : f32
    %329 = vector.broadcast %cst_102 : f32 to vector<8x128xf32>
    %330 = arith.select %327, %329, %318 : vector<8x128xi1>, vector<8x128xf32>
    %cst_103 = arith.constant 0.000000e+00 : f32
    %331 = vector.broadcast %cst_103 : f32 to vector<8x128xf32>
    %332 = arith.select %327, %331, %320 : vector<8x128xi1>, vector<8x128xf32>
    %cst_104 = arith.constant 0.000000e+00 : f32
    %333 = vector.broadcast %cst_104 : f32 to vector<8x128xf32>
    %334 = arith.select %327, %333, %322 : vector<8x128xi1>, vector<8x128xf32>
    %335 = arith.cmpf olt, %326, %328 : vector<8x128xf32>
    %336 = arith.minimumf %326, %328 : vector<8x128xf32>
    %cst_105 = arith.constant -1.000000e+00 : f32
    %337 = vector.broadcast %cst_105 : f32 to vector<8x128xf32>
    %338 = arith.select %335, %337, %330 : vector<8x128xi1>, vector<8x128xf32>
    %cst_106 = arith.constant 0.000000e+00 : f32
    %339 = vector.broadcast %cst_106 : f32 to vector<8x128xf32>
    %340 = arith.select %335, %339, %332 : vector<8x128xi1>, vector<8x128xf32>
    %cst_107 = arith.constant 0.000000e+00 : f32
    %341 = vector.broadcast %cst_107 : f32 to vector<8x128xf32>
    %342 = arith.select %335, %341, %334 : vector<8x128xi1>, vector<8x128xf32>
    %343 = arith.addf %75, %85 : vector<8x128xf32>
    %344 = arith.addf %95, %120 : vector<8x128xf32>
    %345 = arith.addf %344, %122 : vector<8x128xf32>
    %346 = arith.addf %90, %345 : vector<8x128xf32>
    %347 = arith.addf %343, %343 : vector<8x128xf32>
    %348 = arith.subf %346, %347 : vector<8x128xf32>
    %349 = arith.addf %346, %347 : vector<8x128xf32>
    %350 = arith.cmpf olt, %348, %336 : vector<8x128xf32>
    %351 = arith.minimumf %348, %336 : vector<8x128xf32>
    %cst_108 = arith.constant 1.000000e+00 : f32
    %352 = vector.broadcast %cst_108 : f32 to vector<8x128xf32>
    %353 = arith.select %350, %352, %338 : vector<8x128xi1>, vector<8x128xf32>
    %cst_109 = arith.constant 0.000000e+00 : f32
    %354 = vector.broadcast %cst_109 : f32 to vector<8x128xf32>
    %355 = arith.select %350, %354, %340 : vector<8x128xi1>, vector<8x128xf32>
    %cst_110 = arith.constant 1.000000e+00 : f32
    %356 = vector.broadcast %cst_110 : f32 to vector<8x128xf32>
    %357 = arith.select %350, %356, %342 : vector<8x128xi1>, vector<8x128xf32>
    %358 = arith.cmpf olt, %349, %351 : vector<8x128xf32>
    %359 = arith.minimumf %349, %351 : vector<8x128xf32>
    %cst_111 = arith.constant -1.000000e+00 : f32
    %360 = vector.broadcast %cst_111 : f32 to vector<8x128xf32>
    %361 = arith.select %358, %360, %353 : vector<8x128xi1>, vector<8x128xf32>
    %cst_112 = arith.constant 0.000000e+00 : f32
    %362 = vector.broadcast %cst_112 : f32 to vector<8x128xf32>
    %363 = arith.select %358, %362, %355 : vector<8x128xi1>, vector<8x128xf32>
    %cst_113 = arith.constant -1.000000e+00 : f32
    %364 = vector.broadcast %cst_113 : f32 to vector<8x128xf32>
    %365 = arith.select %358, %364, %357 : vector<8x128xi1>, vector<8x128xf32>
    %366 = arith.addf %75, %80 : vector<8x128xf32>
    %367 = arith.addf %95, %110 : vector<8x128xf32>
    %cst_114 = arith.constant 0.000000e+00 : f32
    %368 = vector.broadcast %cst_114 : f32 to vector<8x128xf32>
    %369 = arith.subf %368, %85 : vector<8x128xf32>
    %370 = arith.addf %366, %369 : vector<8x128xf32>
    %371 = arith.addf %367, %120 : vector<8x128xf32>
    %372 = arith.addf %371, %121 : vector<8x128xf32>
    %373 = arith.subf %372, %122 : vector<8x128xf32>
    %374 = arith.subf %373, %123 : vector<8x128xf32>
    %375 = arith.addf %90, %374 : vector<8x128xf32>
    %376 = arith.addf %370, %370 : vector<8x128xf32>
    %377 = arith.subf %375, %376 : vector<8x128xf32>
    %378 = arith.addf %375, %376 : vector<8x128xf32>
    %379 = arith.cmpf olt, %377, %359 : vector<8x128xf32>
    %380 = arith.minimumf %377, %359 : vector<8x128xf32>
    %cst_115 = arith.constant 1.000000e+00 : f32
    %381 = vector.broadcast %cst_115 : f32 to vector<8x128xf32>
    %382 = arith.select %379, %381, %361 : vector<8x128xi1>, vector<8x128xf32>
    %cst_116 = arith.constant 1.000000e+00 : f32
    %383 = vector.broadcast %cst_116 : f32 to vector<8x128xf32>
    %384 = arith.select %379, %383, %363 : vector<8x128xi1>, vector<8x128xf32>
    %cst_117 = arith.constant -1.000000e+00 : f32
    %385 = vector.broadcast %cst_117 : f32 to vector<8x128xf32>
    %386 = arith.select %379, %385, %365 : vector<8x128xi1>, vector<8x128xf32>
    %387 = arith.cmpf olt, %378, %380 : vector<8x128xf32>
    %388 = arith.minimumf %378, %380 : vector<8x128xf32>
    %cst_118 = arith.constant -1.000000e+00 : f32
    %389 = vector.broadcast %cst_118 : f32 to vector<8x128xf32>
    %390 = arith.select %387, %389, %382 : vector<8x128xi1>, vector<8x128xf32>
    %cst_119 = arith.constant -1.000000e+00 : f32
    %391 = vector.broadcast %cst_119 : f32 to vector<8x128xf32>
    %392 = arith.select %387, %391, %384 : vector<8x128xi1>, vector<8x128xf32>
    %cst_120 = arith.constant 1.000000e+00 : f32
    %393 = vector.broadcast %cst_120 : f32 to vector<8x128xf32>
    %394 = arith.select %387, %393, %386 : vector<8x128xi1>, vector<8x128xf32>
    %395 = arith.addf %75, %80 : vector<8x128xf32>
    %396 = arith.addf %95, %110 : vector<8x128xf32>
    %397 = arith.addf %396, %121 : vector<8x128xf32>
    %398 = arith.addf %90, %397 : vector<8x128xf32>
    %399 = arith.addf %395, %395 : vector<8x128xf32>
    %400 = arith.subf %398, %399 : vector<8x128xf32>
    %401 = arith.addf %398, %399 : vector<8x128xf32>
    %402 = arith.cmpf olt, %400, %388 : vector<8x128xf32>
    %403 = arith.minimumf %400, %388 : vector<8x128xf32>
    %cst_121 = arith.constant 1.000000e+00 : f32
    %404 = vector.broadcast %cst_121 : f32 to vector<8x128xf32>
    %405 = arith.select %402, %404, %390 : vector<8x128xi1>, vector<8x128xf32>
    %cst_122 = arith.constant 1.000000e+00 : f32
    %406 = vector.broadcast %cst_122 : f32 to vector<8x128xf32>
    %407 = arith.select %402, %406, %392 : vector<8x128xi1>, vector<8x128xf32>
    %cst_123 = arith.constant 0.000000e+00 : f32
    %408 = vector.broadcast %cst_123 : f32 to vector<8x128xf32>
    %409 = arith.select %402, %408, %394 : vector<8x128xi1>, vector<8x128xf32>
    %410 = arith.cmpf olt, %401, %403 : vector<8x128xf32>
    %411 = arith.minimumf %401, %403 : vector<8x128xf32>
    %cst_124 = arith.constant -1.000000e+00 : f32
    %412 = vector.broadcast %cst_124 : f32 to vector<8x128xf32>
    %413 = arith.select %410, %412, %405 : vector<8x128xi1>, vector<8x128xf32>
    %cst_125 = arith.constant -1.000000e+00 : f32
    %414 = vector.broadcast %cst_125 : f32 to vector<8x128xf32>
    %415 = arith.select %410, %414, %407 : vector<8x128xi1>, vector<8x128xf32>
    %cst_126 = arith.constant 0.000000e+00 : f32
    %416 = vector.broadcast %cst_126 : f32 to vector<8x128xf32>
    %417 = arith.select %410, %416, %409 : vector<8x128xi1>, vector<8x128xf32>
    %418 = arith.addf %75, %80 : vector<8x128xf32>
    %419 = arith.addf %95, %110 : vector<8x128xf32>
    %420 = arith.addf %418, %85 : vector<8x128xf32>
    %421 = arith.addf %419, %120 : vector<8x128xf32>
    %422 = arith.addf %421, %121 : vector<8x128xf32>
    %423 = arith.addf %422, %122 : vector<8x128xf32>
    %424 = arith.addf %423, %123 : vector<8x128xf32>
    %425 = arith.addf %90, %424 : vector<8x128xf32>
    %426 = arith.addf %420, %420 : vector<8x128xf32>
    %427 = arith.subf %425, %426 : vector<8x128xf32>
    %428 = arith.addf %425, %426 : vector<8x128xf32>
    %429 = arith.cmpf olt, %427, %411 : vector<8x128xf32>
    %430 = arith.minimumf %427, %411 : vector<8x128xf32>
    %cst_127 = arith.constant 1.000000e+00 : f32
    %431 = vector.broadcast %cst_127 : f32 to vector<8x128xf32>
    %432 = arith.select %429, %431, %413 : vector<8x128xi1>, vector<8x128xf32>
    %cst_128 = arith.constant 1.000000e+00 : f32
    %433 = vector.broadcast %cst_128 : f32 to vector<8x128xf32>
    %434 = arith.select %429, %433, %415 : vector<8x128xi1>, vector<8x128xf32>
    %cst_129 = arith.constant 1.000000e+00 : f32
    %435 = vector.broadcast %cst_129 : f32 to vector<8x128xf32>
    %436 = arith.select %429, %435, %417 : vector<8x128xi1>, vector<8x128xf32>
    %437 = arith.cmpf olt, %428, %430 : vector<8x128xf32>
    %cst_130 = arith.constant -1.000000e+00 : f32
    %438 = vector.broadcast %cst_130 : f32 to vector<8x128xf32>
    %439 = arith.select %437, %438, %432 : vector<8x128xi1>, vector<8x128xf32>
    %cst_131 = arith.constant -1.000000e+00 : f32
    %440 = vector.broadcast %cst_131 : f32 to vector<8x128xf32>
    %441 = arith.select %437, %440, %434 : vector<8x128xi1>, vector<8x128xf32>
    %cst_132 = arith.constant -1.000000e+00 : f32
    %442 = vector.broadcast %cst_132 : f32 to vector<8x128xf32>
    %443 = arith.select %437, %442, %436 : vector<8x128xi1>, vector<8x128xf32>
    %444 = arith.mulf %439, %36 : vector<8x128xf32>
    %445 = arith.mulf %441, %42 : vector<8x128xf32>
    %446 = arith.addf %444, %445 : vector<8x128xf32>
    %447 = arith.mulf %443, %48 : vector<8x128xf32>
    %448 = arith.addf %446, %447 : vector<8x128xf32>
    %449 = arith.subf %60, %448 : vector<8x128xf32>
    %450 = arith.mulf %439, %38 : vector<8x128xf32>
    %451 = arith.mulf %441, %44 : vector<8x128xf32>
    %452 = arith.addf %450, %451 : vector<8x128xf32>
    %453 = arith.mulf %443, %50 : vector<8x128xf32>
    %454 = arith.addf %452, %453 : vector<8x128xf32>
    %455 = arith.subf %65, %454 : vector<8x128xf32>
    %456 = arith.mulf %439, %40 : vector<8x128xf32>
    %457 = arith.mulf %441, %46 : vector<8x128xf32>
    %458 = arith.addf %456, %457 : vector<8x128xf32>
    %459 = arith.mulf %443, %52 : vector<8x128xf32>
    %460 = arith.addf %458, %459 : vector<8x128xf32>
    %461 = arith.subf %70, %460 : vector<8x128xf32>
    %462 = arith.mulf %44, %52 : vector<8x128xf32>
    %463 = arith.mulf %46, %50 : vector<8x128xf32>
    %464 = arith.subf %462, %463 : vector<8x128xf32>
    %465 = arith.mulf %46, %48 : vector<8x128xf32>
    %466 = arith.mulf %42, %52 : vector<8x128xf32>
    %467 = arith.subf %465, %466 : vector<8x128xf32>
    %468 = arith.mulf %42, %50 : vector<8x128xf32>
    %469 = arith.mulf %44, %48 : vector<8x128xf32>
    %470 = arith.subf %468, %469 : vector<8x128xf32>
    %471 = arith.mulf %40, %50 : vector<8x128xf32>
    %472 = arith.mulf %38, %52 : vector<8x128xf32>
    %473 = arith.subf %471, %472 : vector<8x128xf32>
    %474 = arith.mulf %36, %52 : vector<8x128xf32>
    %475 = arith.mulf %40, %48 : vector<8x128xf32>
    %476 = arith.subf %474, %475 : vector<8x128xf32>
    %477 = arith.mulf %38, %48 : vector<8x128xf32>
    %478 = arith.mulf %36, %50 : vector<8x128xf32>
    %479 = arith.subf %477, %478 : vector<8x128xf32>
    %480 = arith.mulf %38, %46 : vector<8x128xf32>
    %481 = arith.mulf %40, %44 : vector<8x128xf32>
    %482 = arith.subf %480, %481 : vector<8x128xf32>
    %483 = arith.mulf %40, %42 : vector<8x128xf32>
    %484 = arith.mulf %36, %46 : vector<8x128xf32>
    %485 = arith.subf %483, %484 : vector<8x128xf32>
    %486 = arith.mulf %36, %44 : vector<8x128xf32>
    %487 = arith.mulf %38, %42 : vector<8x128xf32>
    %488 = arith.subf %486, %487 : vector<8x128xf32>
    %489 = arith.mulf %36, %464 : vector<8x128xf32>
    %490 = arith.mulf %38, %467 : vector<8x128xf32>
    %491 = arith.addf %489, %490 : vector<8x128xf32>
    %492 = arith.mulf %40, %470 : vector<8x128xf32>
    %493 = arith.addf %491, %492 : vector<8x128xf32>
    %494 = tpu.reciprocal %493 : vector<8x128xf32> -> vector<8x128xf32>
    %495 = arith.mulf %449, %464 : vector<8x128xf32>
    %496 = arith.mulf %455, %467 : vector<8x128xf32>
    %497 = arith.addf %495, %496 : vector<8x128xf32>
    %498 = arith.mulf %461, %470 : vector<8x128xf32>
    %499 = arith.addf %497, %498 : vector<8x128xf32>
    %500 = arith.mulf %499, %494 : vector<8x128xf32>
    %501 = math.floor %500 : vector<8x128xf32>
    %502 = arith.subf %500, %501 : vector<8x128xf32>
    %c0_133 = arith.constant 0 : index
    %c0_134 = arith.constant 0 : index
    %c0_135 = arith.constant 0 : index
    %503 = vector.load %arg6[%c0_133, %c0_134, %c0_135] : memref<3x8x128xf32, #tpu.memory_space<vmem>>, vector<1x8x128xf32>
    %504 = vector.shape_cast %503 : vector<1x8x128xf32> to vector<8x128xf32>
    %505 = vector.shape_cast %502 : vector<8x128xf32> to vector<1x8x128xf32>
    tpu.vector_store %arg6[%c0_133, %c0_134, %c0_135], %505 {strides = array<i32>} : memref<3x8x128xf32, #tpu.memory_space<vmem>>, vector<1x8x128xf32>,
    %506 = arith.mulf %449, %473 : vector<8x128xf32>
    %507 = arith.mulf %455, %476 : vector<8x128xf32>
    %508 = arith.addf %506, %507 : vector<8x128xf32>
    %509 = arith.mulf %461, %479 : vector<8x128xf32>
    %510 = arith.addf %508, %509 : vector<8x128xf32>
    %511 = arith.mulf %510, %494 : vector<8x128xf32>
    %512 = math.floor %511 : vector<8x128xf32>
    %513 = arith.subf %511, %512 : vector<8x128xf32>
    %c1_136 = arith.constant 1 : index
    %c0_137 = arith.constant 0 : index
    %c0_138 = arith.constant 0 : index
    %514 = vector.load %arg6[%c1_136, %c0_137, %c0_138] : memref<3x8x128xf32, #tpu.memory_space<vmem>>, vector<1x8x128xf32>
    %515 = vector.shape_cast %514 : vector<1x8x128xf32> to vector<8x128xf32>
    %516 = vector.shape_cast %513 : vector<8x128xf32> to vector<1x8x128xf32>
    tpu.vector_store %arg6[%c1_136, %c0_137, %c0_138], %516 {strides = array<i32>} : memref<3x8x128xf32, #tpu.memory_space<vmem>>, vector<1x8x128xf32>,
    %517 = arith.mulf %449, %482 : vector<8x128xf32>
    %518 = arith.mulf %455, %485 : vector<8x128xf32>
    %519 = arith.addf %517, %518 : vector<8x128xf32>
    %520 = arith.mulf %461, %488 : vector<8x128xf32>
    %521 = arith.addf %519, %520 : vector<8x128xf32>
    %522 = arith.mulf %521, %494 : vector<8x128xf32>
    %523 = math.floor %522 : vector<8x128xf32>
    %524 = arith.subf %522, %523 : vector<8x128xf32>
    %c2_139 = arith.constant 2 : index
    %c0_140 = arith.constant 0 : index
    %c0_141 = arith.constant 0 : index
    %525 = vector.load %arg6[%c2_139, %c0_140, %c0_141] : memref<3x8x128xf32, #tpu.memory_space<vmem>>, vector<1x8x128xf32>
    %526 = vector.shape_cast %525 : vector<1x8x128xf32> to vector<8x128xf32>
    %527 = vector.shape_cast %524 : vector<8x128xf32> to vector<1x8x128xf32>
    tpu.vector_store %arg6[%c2_139, %c0_140, %c0_141], %527 {strides = array<i32>} : memref<3x8x128xf32, #tpu.memory_space<vmem>>, vector<1x8x128xf32>,
    return
  }
  func.func @transform_0(%arg0: i32) -> (i32, i32, i32) {
    %c0_i32 = arith.constant 0 : i32
    %c0_i32_0 = arith.constant 0 : i32
    %c0_i32_1 = arith.constant 0 : i32
    return %c0_i32, %arg0, %c0_i32_0 : i32, i32, i32
  }
  func.func @transform_1(%arg0: i32) -> (i32, i32, i32) {
    %c0_i32 = arith.constant 0 : i32
    %c0_i32_0 = arith.constant 0 : i32
    %c0_i32_1 = arith.constant 0 : i32
    return %c0_i32, %arg0, %c0_i32_0 : i32, i32, i32
  }
  func.func @transform_2(%arg0: i32) -> (i32, i32, i32) {
    %c0_i32 = arith.constant 0 : i32
    %c0_i32_0 = arith.constant 0 : i32
    %c0_i32_1 = arith.constant 0 : i32
    return %c0_i32, %arg0, %c0_i32_0 : i32, i32, i32
  }
  func.func @transform_3(%arg0: i32) -> (i32, i32, i32) {
    %c0_i32 = arith.constant 0 : i32
    %c0_i32_0 = arith.constant 0 : i32
    %c0_i32_1 = arith.constant 0 : i32
    return %c0_i32, %arg0, %c0_i32_0 : i32, i32, i32
  }
  func.func @transform_4(%arg0: i32) -> (i32, i32, i32) {
    %c0_i32 = arith.constant 0 : i32
    %c0_i32_0 = arith.constant 0 : i32
    %c0_i32_1 = arith.constant 0 : i32
    return %c0_i32, %arg0, %c0_i32_0 : i32, i32, i32
  }
  func.func @transform_5(%arg0: i32) -> (i32, i32, i32) {
    %c0_i32 = arith.constant 0 : i32
    %c0_i32_0 = arith.constant 0 : i32
    %c0_i32_1 = arith.constant 0 : i32
    return %c0_i32, %arg0, %c0_i32_0 : i32, i32, i32
  }
}

</mosaic_0001>

<llo_original>
// kernel: tpu_custom_call.1
$region0: #{tpu_custom_call.1}
  #allocation0 [shape = 'u32[]', space=smem, size = 0x4, offset = 0x4, fixed_abs, tag = 'smem constant byte address 0x4 - core index']
  #allocation1 [shape = 'u32[144,128]{1,0:T(1,128)}', space=vmem, size = 0x12000, scoped, tag = 'internal scratch']
  %s0 = inlined_call_operand.hbm [shape: f32[3,8,128], index: 0, kind: input, shape index: {}]
  %s1 = inlined_call_operand.hbm [shape: f32[3,8,128], index: 1, kind: input, shape index: {}]
  %s2 = inlined_call_operand.hbm [shape: f32[1,8,128], index: 2, kind: input, shape index: {}]
  %s3 = inlined_call_operand.hbm [shape: f32[9,8,128], index: 3, kind: input, shape index: {}]
  %s4 = inlined_call_operand.hbm [shape: f32[3,8,128], index: 4, kind: output, shape index: {0}]
  %s5 = inlined_call_operand.hbm [shape: f32[3,8,128], index: 5, kind: output, shape index: {1}]
  %6 = xla_tuple %s4, %s5
  %s7 = sld [smem:[#allocation0]]
  $region50: #{tpu_custom_call.1} parent=0
    _
  %s9 = ssub.s32 1, %s7
  %s10 = scalar_select 0, %s9, %s7
  $region1: #{tpu_custom_call.1} parent=0
    #allocation2 [shape = 'u8[12288]{0}', space=vmem, size = 0x3000, scoped, tag = 'input window, operand 0, single buffered']
    #allocation3 [shape = 's32[1]{0}', space=sflag, size = 0x4, scoped, tag = 'scoped memory for tpu_custom_call.1']
    #allocation4 [shape = 's32[1]{0}', space=sflag, size = 0x4, scoped, tag = 'scoped memory for tpu_custom_call.1']
    #allocation5 [shape = 'u8[12288]{0}', space=vmem, size = 0x3000, scoped, tag = 'input window, operand 1, single buffered']
    #allocation6 [shape = 's32[1]{0}', space=sflag, size = 0x4, scoped, tag = 'scoped memory for tpu_custom_call.1']
    #allocation7 [shape = 'u8[4096]{0}', space=vmem, size = 0x1000, scoped, tag = 'input window, operand 2, single buffered']
    #allocation8 [shape = 'u8[36864]{0}', space=vmem, size = 0x9000, scoped, tag = 'input window, operand 3, single buffered']
    #allocation9 [shape = 's32[1]{0}', space=sflag, size = 0x4, scoped, tag = 'scoped memory for tpu_custom_call.1']
    #allocation10 [shape = 'u8[12288]{0}', space=vmem, size = 0x3000, scoped, tag = 'output window, operand 0, single buffered']
    #allocation11 [shape = 'u8[12288]{0}', space=vmem, size = 0x3000, scoped, tag = 'output window, operand 1, single buffered']
    #allocation12 [shape = 's32[1]{0}', space=sflag, size = 0x4, scoped, tag = 'scoped memory for tpu_custom_call.1']
    %11 = vsyncpa [#allocation3], 0
    %12 = vsyncpa [#allocation6], 0
    %13 = vsyncpa [#allocation9], 0
    %14 = vsyncpa [#allocation4], 0
    %15 = vsyncpa [#allocation12], 0
    // Predicated region
    $region2: #{tpu_custom_call.1} parent=1 // pred_check
      _
    $region3: #{tpu_custom_call.1} parent=1 // pred_check_branch
      %17 = sbr.rel (0) target = $region5
    $region4: #{tpu_custom_call.1} parent=1 // pred_region
      %s19 = ssub.s32 384, 384
      %20 = vsyncadd [#allocation3], %s19
      %s21 = sshll.u32 [#allocation2], 4
      %s22 = int_to_ptr.vmem [resolvable:$true] %s21
      %27 = dma.hbm_to_vmem [thread:$0]  %s0, 384, %s22, [#allocation3], 128, 128, 8
    $region5: #{tpu_custom_call.1} parent=1 // pred_fallthru
      _
    // Predicated region
    $region6: #{tpu_custom_call.1} parent=1 // pred_check
      _
    $region7: #{tpu_custom_call.1} parent=1 // pred_check_branch
      %29 = sbr.rel (0) target = $region9
    $region8: #{tpu_custom_call.1} parent=1 // pred_region
      %s31 = ssub.s32 384, 384
      %32 = vsyncadd [#allocation6], %s31
      %s33 = sshll.u32 [#allocation5], 4
      %s34 = int_to_ptr.vmem [resolvable:$true] %s33
      %39 = dma.hbm_to_vmem [thread:$0]  %s1, 384, %s34, [#allocation6], 128, 128, 8
    $region9: #{tpu_custom_call.1} parent=1 // pred_fallthru
      _
    // Predicated region
    $region10: #{tpu_custom_call.1} parent=1 // pred_check
      _
    $region11: #{tpu_custom_call.1} parent=1 // pred_check_branch
      %41 = sbr.rel (0) target = $region13
    $region12: #{tpu_custom_call.1} parent=1 // pred_region
      %s43 = ssub.s32 128, 128
      %44 = vsyncadd [#allocation6], %s43
      %s46 = sshll.u32 [#allocation7], 4
      %s47 = int_to_ptr.vmem [resolvable:$true] %s46
      %49 = dma.hbm_to_vmem [thread:$0]  %s2, 128, %s47, [#allocation6]
    $region13: #{tpu_custom_call.1} parent=1 // pred_fallthru
      _
    // Predicated region
    $region14: #{tpu_custom_call.1} parent=1 // pred_check
      _
    $region15: #{tpu_custom_call.1} parent=1 // pred_check_branch
      %51 = sbr.rel (0) target = $region17
    $region16: #{tpu_custom_call.1} parent=1 // pred_region
      %s53 = ssub.s32 1152, 1152
      %54 = vsyncadd [#allocation9], %s53
      %s55 = sshll.u32 [#allocation8], 4
      %s56 = int_to_ptr.vmem [resolvable:$true] %s55
      %61 = dma.hbm_to_vmem [thread:$0]  %s3, 1152, %s56, [#allocation9], 128, 128, 8
    $region17: #{tpu_custom_call.1} parent=1 // pred_fallthru
      _
    // Predicated region
    $region18: #{tpu_custom_call.1} parent=1 // pred_check
      _
    $region19: #{tpu_custom_call.1} parent=1 // pred_check_branch
      %63 = sbr.rel (0) target = $region21
    $region20: #{tpu_custom_call.1} parent=1 // pred_region
      %64 = dma.done [#allocation3], 384
    $region21: #{tpu_custom_call.1} parent=1 // pred_fallthru
      _
    // Predicated region
    $region22: #{tpu_custom_call.1} parent=1 // pred_check
      _
    $region23: #{tpu_custom_call.1} parent=1 // pred_check_branch
      %66 = sbr.rel (0) target = $region25
    $region24: #{tpu_custom_call.1} parent=1 // pred_region
      %67 = dma.done [#allocation6], 384
    $region25: #{tpu_custom_call.1} parent=1 // pred_fallthru
      _
    // Predicated region
    $region26: #{tpu_custom_call.1} parent=1 // pred_check
      _
    $region27: #{tpu_custom_call.1} parent=1 // pred_check_branch
      %69 = sbr.rel (0) target = $region29
    $region28: #{tpu_custom_call.1} parent=1 // pred_region
      %70 = dma.done [#allocation6], 128
    $region29: #{tpu_custom_call.1} parent=1 // pred_fallthru
      _
    // Predicated region
    $region30: #{tpu_custom_call.1} parent=1 // pred_check
      _
    $region31: #{tpu_custom_call.1} parent=1 // pred_check_branch
      %72 = sbr.rel (0) target = $region33
    $region32: #{tpu_custom_call.1} parent=1 // pred_region
      %73 = dma.done [#allocation9], 1152
    $region33: #{tpu_custom_call.1} parent=1 // pred_fallthru
      _
    %v74 = vld [vmem:[#allocation7] sm:$0xff]
    %v75 = vld [vmem:[#allocation2] sm:$0xff]
    %s76 = scalar_lea.vmem [#allocation2], 8
    %v77 = vld [vmem:[%s76] sm:$0xff]
    %s78 = scalar_lea.vmem [#allocation2], 16
    %v79 = vld [vmem:[%s78] sm:$0xff]
    %v80 = vld [vmem:[#allocation5] sm:$0xff]
    %v81 = vmul.f32 %v80, %v74
    %v82 = vadd.f32 %v75, %v81
    %v83 = vfloor.f32 %v82
    %v84 = vsub.f32 %v82, %v83
    %85 = vst [vmem:[#allocation10] sm:$0xff] %v84
    %s86 = scalar_lea.vmem [#allocation5], 8
    %v87 = vld [vmem:[%s86] sm:$0xff]
    %v88 = vmul.f32 %v87, %v74
    %v89 = vadd.f32 %v77, %v88
    %v90 = vfloor.f32 %v89
    %v91 = vsub.f32 %v89, %v90
    %s92 = scalar_lea.vmem [#allocation10], 8
    %93 = vst [vmem:[%s92] sm:$0xff] %v91
    %s94 = scalar_lea.vmem [#allocation5], 16
    %v95 = vld [vmem:[%s94] sm:$0xff]
    %v96 = vmul.f32 %v95, %v74
    %v97 = vadd.f32 %v79, %v96
    %v98 = vfloor.f32 %v97
    %v99 = vsub.f32 %v97, %v98
    %s100 = scalar_lea.vmem [#allocation10], 16
    %101 = vst [vmem:[%s100] sm:$0xff] %v99
    %v102 = vld [vmem:[#allocation8] sm:$0xff]
    %s103 = scalar_lea.vmem [#allocation8], 8
    %v104 = vld [vmem:[%s103] sm:$0xff]
    %s105 = scalar_lea.vmem [#allocation8], 16
    %v106 = vld [vmem:[%s105] sm:$0xff]
    %s107 = scalar_lea.vmem [#allocation8], 24
    %v108 = vld [vmem:[%s107] sm:$0xff]
    %s109 = scalar_lea.vmem [#allocation8], 32
    %v110 = vld [vmem:[%s109] sm:$0xff]
    %s111 = scalar_lea.vmem [#allocation8], 40
    %v112 = vld [vmem:[%s111] sm:$0xff]
    %s113 = scalar_lea.vmem [#allocation8], 48
    %v114 = vld [vmem:[%s113] sm:$0xff]
    %s115 = scalar_lea.vmem [#allocation8], 56
    %v116 = vld [vmem:[%s115] sm:$0xff]
    %s117 = scalar_lea.vmem [#allocation8], 64
    %v118 = vld [vmem:[%s117] sm:$0xff]
    %v119 = vsub.f32 %v84, %v75
    %v120 = vsub.f32 %v91, %v77
    %v121 = vsub.f32 %v99, %v79
    %v122 = vmul.f32 %v119, %v102
    %v123 = vmul.f32 %v120, %v108
    %v124 = vadd.f32 %v122, %v123
    %v125 = vmul.f32 %v121, %v114
    %v126 = vadd.f32 %v124, %v125
    %v127 = vmul.f32 %v119, %v104
    %v128 = vmul.f32 %v120, %v110
    %v129 = vadd.f32 %v127, %v128
    %v130 = vmul.f32 %v121, %v116
    %v131 = vadd.f32 %v129, %v130
    %v132 = vmul.f32 %v119, %v106
    %v133 = vmul.f32 %v120, %v112
    %v134 = vadd.f32 %v132, %v133
    %v135 = vmul.f32 %v121, %v118
    %v136 = vadd.f32 %v134, %v135
    %v137 = vmul.f32 %v126, %v102
    %v138 = vmul.f32 %v131, %v104
    %v139 = vadd.f32 %v137, %v138
    %v140 = vmul.f32 %v136, %v106
    %v141 = vadd.f32 %v139, %v140
    %v142 = vmul.f32 %v126, %v108
    %v143 = vmul.f32 %v131, %v110
    %v144 = vadd.f32 %v142, %v143
    %v145 = vmul.f32 %v136, %v112
    %v146 = vadd.f32 %v144, %v145
    %v147 = vmul.f32 %v126, %v114
    %v148 = vmul.f32 %v131, %v116
    %v149 = vadd.f32 %v147, %v148
    %v150 = vmul.f32 %v136, %v118
    %v151 = vadd.f32 %v149, %v150
    %v152 = vmul.f32 %v126, %v126
    %v153 = vmul.f32 %v131, %v131
    %v154 = vadd.f32 %v152, %v153
    %v155 = vmul.f32 %v136, %v136
    %v156 = vadd.f32 %v154, %v155
    %v157 = vmul.f32 %v102, %v102
    %v158 = vmul.f32 %v104, %v104
    %v159 = vadd.f32 %v157, %v158
    %v160 = vmul.f32 %v106, %v106
    %v161 = vadd.f32 %v159, %v160
    %v162 = vmul.f32 %v102, %v108
    %v163 = vmul.f32 %v104, %v110
    %v164 = vadd.f32 %v162, %v163
    %v165 = vmul.f32 %v106, %v112
    %v166 = vadd.f32 %v164, %v165
    %v167 = vmul.f32 %v102, %v114
    %v168 = vmul.f32 %v104, %v116
    %v169 = vadd.f32 %v167, %v168
    %v170 = vmul.f32 %v106, %v118
    %v171 = vadd.f32 %v169, %v170
    %v172 = vmul.f32 %v108, %v108
    %v173 = vmul.f32 %v110, %v110
    %v174 = vadd.f32 %v172, %v173
    %v175 = vmul.f32 %v112, %v112
    %v176 = vadd.f32 %v174, %v175
    %v177 = vmul.f32 %v108, %v114
    %v178 = vmul.f32 %v110, %v116
    %v179 = vadd.f32 %v177, %v178
    %v180 = vmul.f32 %v112, %v118
    %v181 = vadd.f32 %v179, %v180
    %v182 = vmul.f32 %v114, %v114
    %v183 = vmul.f32 %v116, %v116
    %v184 = vadd.f32 %v182, %v183
    %v185 = vmul.f32 %v118, %v118
    %v186 = vadd.f32 %v184, %v185
    %v187 = vadd.f32 %v166, %v166
    %v188 = vadd.f32 %v171, %v171
    %v189 = vadd.f32 %v181, %v181
    %v190 = vadd.f32 %v156, %v186
    %v191 = vadd.f32 %v151, %v151
    %v192 = vsub.f32 %v190, %v191
    %v193 = vadd.f32 %v190, %v191
    %vm194 = vcmp.lt.f32.partialorder %v192, %v156
    %v195 = vmin.f32 %v192, %v156
    %v196 = vsel %vm194, 1.0, 0.0
    %vm197 = vcmp.lt.f32.partialorder %v193, %v195
    %v198 = vmin.f32 %v193, %v195
    %v199 = vsel %vm197, -1.0, %v196
    %v200 = vsub.f32 0.0, %v151
    %v201 = vadd.f32 %v146, %v200
    %v202 = vadd.f32 %v176, %v186
    %v203 = vsub.f32 %v202, %v189
    %v204 = vadd.f32 %v156, %v203
    %v205 = vadd.f32 %v201, %v201
    %v206 = vsub.f32 %v204, %v205
    %v207 = vadd.f32 %v204, %v205
    %vm208 = vcmp.lt.f32.partialorder %v206, %v198
    %v209 = vmin.f32 %v206, %v198
    %v210 = vsel %vm208, 1.0, 0.0
    %v211 = vsel %vm208, -1.0, %v199
    %vm212 = vcmp.lt.f32.partialorder %v207, %v209
    %v213 = vmin.f32 %v207, %v209
    %v214 = vsel %vm212, -1.0, %v210
    %v215 = vsel %vm212, 1.0, %v211
    %v216 = vadd.f32 %v156, %v176
    %v217 = vadd.f32 %v146, %v146
    %v218 = vsub.f32 %v216, %v217
    %v219 = vadd.f32 %v216, %v217
    %vm220 = vcmp.lt.f32.partialorder %v218, %v213
    %v221 = vmin.f32 %v218, %v213
    %v222 = vsel %vm220, 1.0, %v214
    %v223 = vsel %vm220, 0.0, %v215
    %vm224 = vcmp.lt.f32.partialorder %v219, %v221
    %v225 = vmin.f32 %v219, %v221
    %v226 = vsel %vm224, -1.0, %v222
    %v227 = vsel %vm224, 0.0, %v223
    %v228 = vadd.f32 %v146, %v151
    %v229 = vadd.f32 %v202, %v189
    %v230 = vadd.f32 %v156, %v229
    %v231 = vadd.f32 %v228, %v228
    %v232 = vsub.f32 %v230, %v231
    %v233 = vadd.f32 %v230, %v231
    %vm234 = vcmp.lt.f32.partialorder %v232, %v225
    %v235 = vmin.f32 %v232, %v225
    %v236 = vsel %vm234, 1.0, %v226
    %v237 = vsel %vm234, 1.0, %v227
    %vm238 = vcmp.lt.f32.partialorder %v233, %v235
    %v239 = vmin.f32 %v233, %v235
    %v240 = vsel %vm238, -1.0, %v236
    %v241 = vsel %vm238, -1.0, %v237
    %v242 = vsub.f32 0.0, %v146
    %v243 = vadd.f32 %v141, %v242
    %v244 = vadd.f32 %v161, %v176
    %v245 = vadd.f32 %v243, %v200
    %v246 = vadd.f32 %v244, %v186
    %v247 = vsub.f32 %v246, %v187
    %v248 = vsub.f32 %v247, %v188
    %v249 = vadd.f32 %v248, %v189
    %v250 = vadd.f32 %v156, %v249
    %v251 = vadd.f32 %v245, %v245
    %v252 = vsub.f32 %v250, %v251
    %v253 = vadd.f32 %v250, %v251
    %vm254 = vcmp.lt.f32.partialorder %v252, %v239
    %v255 = vmin.f32 %v252, %v239
    %v256 = vsel %vm254, 1.0, 0.0
    %v257 = vsel %vm254, -1.0, %v240
    %v258 = vsel %vm254, -1.0, %v241
    %vm259 = vcmp.lt.f32.partialorder %v253, %v255
    %v260 = vmin.f32 %v253, %v255
    %v261 = vsel %vm259, -1.0, %v256
    %v262 = vsel %vm259, 1.0, %v257
    %v263 = vsel %vm259, 1.0, %v258
    %v264 = vsub.f32 %v244, %v187
    %v265 = vadd.f32 %v156, %v264
    %v266 = vadd.f32 %v243, %v243
    %v267 = vsub.f32 %v265, %v266
    %v268 = vadd.f32 %v265, %v266
    %vm269 = vcmp.lt.f32.partialorder %v267, %v260
    %v270 = vmin.f32 %v267, %v260
    %v271 = vsel %vm269, 1.0, %v261
    %v272 = vsel %vm269, -1.0, %v262
    %v273 = vsel %vm269, 0.0, %v263
    %vm274 = vcmp.lt.f32.partialorder %v268, %v270
    %v275 = vmin.f32 %v268, %v270
    %v276 = vsel %vm274, -1.0, %v271
    %v277 = vsel %vm274, 1.0, %v272
    %v278 = vsel %vm274, 0.0, %v273
    %v279 = vadd.f32 %v243, %v151
    %v280 = vadd.f32 %v247, %v188
    %v281 = vsub.f32 %v280, %v189
    %v282 = vadd.f32 %v156, %v281
    %v283 = vadd.f32 %v279, %v279
    %v284 = vsub.f32 %v282, %v283
    %v285 = vadd.f32 %v282, %v283
    %vm286 = vcmp.lt.f32.partialorder %v284, %v275
    %v287 = vmin.f32 %v284, %v275
    %v288 = vsel %vm286, 1.0, %v276
    %v289 = vsel %vm286, -1.0, %v277
    %v290 = vsel %vm286, 1.0, %v278
    %vm291 = vcmp.lt.f32.partialorder %v285, %v287
    %v292 = vmin.f32 %v285, %v287
    %v293 = vsel %vm291, -1.0, %v288
    %v294 = vsel %vm291, 1.0, %v289
    %v295 = vsel %vm291, -1.0, %v290
    %v296 = vadd.f32 %v141, %v200
    %v297 = vadd.f32 %v161, %v186
    %v298 = vsub.f32 %v297, %v188
    %v299 = vadd.f32 %v156, %v298
    %v300 = vadd.f32 %v296, %v296
    %v301 = vsub.f32 %v299, %v300
    %v302 = vadd.f32 %v299, %v300
    %vm303 = vcmp.lt.f32.partialorder %v301, %v292
    %v304 = vmin.f32 %v301, %v292
    %v305 = vsel %vm303, 1.0, %v293
    %v306 = vsel %vm303, 0.0, %v294
    %v307 = vsel %vm303, -1.0, %v295
    %vm308 = vcmp.lt.f32.partialorder %v302, %v304
    %v309 = vmin.f32 %v302, %v304
    %v310 = vsel %vm308, -1.0, %v305
    %v311 = vsel %vm308, 0.0, %v306
    %v312 = vsel %vm308, 1.0, %v307
    %v313 = vadd.f32 %v156, %v161
    %v314 = vadd.f32 %v141, %v141
    %v315 = vsub.f32 %v313, %v314
    %v316 = vadd.f32 %v313, %v314
    %vm317 = vcmp.lt.f32.partialorder %v315, %v309
    %v318 = vmin.f32 %v315, %v309
    %v319 = vsel %vm317, 1.0, %v310
    %v320 = vsel %vm317, 0.0, %v311
    %v321 = vsel %vm317, 0.0, %v312
    %vm322 = vcmp.lt.f32.partialorder %v316, %v318
    %v323 = vmin.f32 %v316, %v318
    %v324 = vsel %vm322, -1.0, %v319
    %v325 = vsel %vm322, 0.0, %v320
    %v326 = vsel %vm322, 0.0, %v321
    %v327 = vadd.f32 %v141, %v151
    %v328 = vadd.f32 %v297, %v188
    %v329 = vadd.f32 %v156, %v328
    %v330 = vadd.f32 %v327, %v327
    %v331 = vsub.f32 %v329, %v330
    %v332 = vadd.f32 %v329, %v330
    %vm333 = vcmp.lt.f32.partialorder %v331, %v323
    %v334 = vmin.f32 %v331, %v323
    %v335 = vsel %vm333, 1.0, %v324
    %v336 = vsel %vm333, 0.0, %v325
    %v337 = vsel %vm333, 1.0, %v326
    %vm338 = vcmp.lt.f32.partialorder %v332, %v334
    %v339 = vmin.f32 %v332, %v334
    %v340 = vsel %vm338, -1.0, %v335
    %v341 = vsel %vm338, 0.0, %v336
    %v342 = vsel %vm338, -1.0, %v337
    %v343 = vadd.f32 %v141, %v146
    %v344 = vadd.f32 %v343, %v200
    %v345 = vadd.f32 %v246, %v187
    %v346 = vsub.f32 %v345, %v188
    %v347 = vsub.f32 %v346, %v189
    %v348 = vadd.f32 %v156, %v347
    %v349 = vadd.f32 %v344, %v344
    %v350 = vsub.f32 %v348, %v349
    %v351 = vadd.f32 %v348, %v349
    %vm352 = vcmp.lt.f32.partialorder %v350, %v339
    %v353 = vmin.f32 %v350, %v339
    %v354 = vsel %vm352, 1.0, %v340
    %v355 = vsel %vm352, 1.0, %v341
    %v356 = vsel %vm352, -1.0, %v342
    %vm357 = vcmp.lt.f32.partialorder %v351, %v353
    %v358 = vmin.f32 %v351, %v353
    %v359 = vsel %vm357, -1.0, %v354
    %v360 = vsel %vm357, -1.0, %v355
    %v361 = vsel %vm357, 1.0, %v356
    %v362 = vadd.f32 %v244, %v187
    %v363 = vadd.f32 %v156, %v362
    %v364 = vadd.f32 %v343, %v343
    %v365 = vsub.f32 %v363, %v364
    %v366 = vadd.f32 %v363, %v364
    %vm367 = vcmp.lt.f32.partialorder %v365, %v358
    %v368 = vmin.f32 %v365, %v358
    %v369 = vsel %vm367, 1.0, %v359
    %v370 = vsel %vm367, 1.0, %v360
    %v371 = vsel %vm367, 0.0, %v361
    %vm372 = vcmp.lt.f32.partialorder %v366, %v368
    %v373 = vmin.f32 %v366, %v368
    %v374 = vsel %vm372, -1.0, %v369
    %v375 = vsel %vm372, -1.0, %v370
    %v376 = vsel %vm372, 0.0, %v371
    %v377 = vadd.f32 %v343, %v151
    %v378 = vadd.f32 %v345, %v188
    %v379 = vadd.f32 %v378, %v189
    %v380 = vadd.f32 %v156, %v379
    %v381 = vadd.f32 %v377, %v377
    %v382 = vsub.f32 %v380, %v381
    %v383 = vadd.f32 %v380, %v381
    %vm384 = vcmp.lt.f32.partialorder %v382, %v373
    %v385 = vmin.f32 %v382, %v373
    %v386 = vsel %vm384, 1.0, %v374
    %v387 = vsel %vm384, 1.0, %v375
    %v388 = vsel %vm384, 1.0, %v376
    %vm389 = vcmp.lt.f32.partialorder %v383, %v385
    %v390 = vsel %vm389, -1.0, %v386
    %v391 = vsel %vm389, -1.0, %v387
    %v392 = vsel %vm389, -1.0, %v388
    %v393 = vmul.f32 %v390, %v102
    %v394 = vmul.f32 %v391, %v108
    %v395 = vadd.f32 %v393, %v394
    %v396 = vmul.f32 %v392, %v114
    %v397 = vadd.f32 %v395, %v396
    %v398 = vsub.f32 %v126, %v397
    %v399 = vmul.f32 %v390, %v104
    %v400 = vmul.f32 %v391, %v110
    %v401 = vadd.f32 %v399, %v400
    %v402 = vmul.f32 %v392, %v116
    %v403 = vadd.f32 %v401, %v402
    %v404 = vsub.f32 %v131, %v403
    %v405 = vmul.f32 %v390, %v106
    %v406 = vmul.f32 %v391, %v112
    %v407 = vadd.f32 %v405, %v406
    %v408 = vmul.f32 %v392, %v118
    %v409 = vadd.f32 %v407, %v408
    %v410 = vsub.f32 %v136, %v409
    %v411 = vmul.f32 %v110, %v118
    %v412 = vmul.f32 %v112, %v116
    %v413 = vsub.f32 %v411, %v412
    %v414 = vmul.f32 %v112, %v114
    %v415 = vmul.f32 %v108, %v118
    %v416 = vsub.f32 %v414, %v415
    %v417 = vmul.f32 %v108, %v116
    %v418 = vmul.f32 %v110, %v114
    %v419 = vsub.f32 %v417, %v418
    %v420 = vmul.f32 %v106, %v116
    %v421 = vmul.f32 %v104, %v118
    %v422 = vsub.f32 %v420, %v421
    %v423 = vmul.f32 %v102, %v118
    %v424 = vmul.f32 %v106, %v114
    %v425 = vsub.f32 %v423, %v424
    %v426 = vmul.f32 %v104, %v114
    %v427 = vmul.f32 %v102, %v116
    %v428 = vsub.f32 %v426, %v427
    %v429 = vmul.f32 %v104, %v112
    %v430 = vmul.f32 %v106, %v110
    %v431 = vsub.f32 %v429, %v430
    %v432 = vmul.f32 %v106, %v108
    %v433 = vmul.f32 %v102, %v112
    %v434 = vsub.f32 %v432, %v433
    %v435 = vmul.f32 %v102, %v110
    %v436 = vmul.f32 %v104, %v108
    %v437 = vsub.f32 %v435, %v436
    %v438 = vmul.f32 %v102, %v413
    %v439 = vmul.f32 %v104, %v416
    %v440 = vadd.f32 %v438, %v439
    %v441 = vmul.f32 %v106, %v419
    %v442 = vadd.f32 %v440, %v441
    %v443 = vrcp.pop %v442
    %v444 = vmul.f32 %v398, %v413
    %v445 = vmul.f32 %v404, %v416
    %v446 = vadd.f32 %v444, %v445
    %v447 = vmul.f32 %v410, %v419
    %v448 = vadd.f32 %v446, %v447
    %v449 = vmul.f32 %v448, %v443
    %v450 = vfloor.f32 %v449
    %v451 = vsub.f32 %v449, %v450
    %452 = vst [vmem:[#allocation11] sm:$0xff] %v451
    %v453 = vmul.f32 %v398, %v422
    %v454 = vmul.f32 %v404, %v425
    %v455 = vadd.f32 %v453, %v454
    %v456 = vmul.f32 %v410, %v428
    %v457 = vadd.f32 %v455, %v456
    %v458 = vmul.f32 %v457, %v443
    %v459 = vfloor.f32 %v458
    %v460 = vsub.f32 %v458, %v459
    %s461 = scalar_lea.vmem [#allocation11], 8
    %462 = vst [vmem:[%s461] sm:$0xff] %v460
    %v463 = vmul.f32 %v398, %v431
    %v464 = vmul.f32 %v404, %v434
    %v465 = vadd.f32 %v463, %v464
    %v466 = vmul.f32 %v410, %v437
    %v467 = vadd.f32 %v465, %v466
    %v468 = vmul.f32 %v467, %v443
    %v469 = vfloor.f32 %v468
    %v470 = vsub.f32 %v468, %v469
    %s471 = scalar_lea.vmem [#allocation11], 16
    %472 = vst [vmem:[%s471] sm:$0xff] %v470
    // Predicated region
    $region34: #{tpu_custom_call.1} parent=1 // pred_check
      _
    $region35: #{tpu_custom_call.1} parent=1 // pred_check_branch
      %474 = sbr.rel (0) target = $region37
    $region36: #{tpu_custom_call.1} parent=1 // pred_region
      %s476 = ssub.s32 384, 384
      %477 = vsyncadd [#allocation4], %s476
      %s478 = sshll.u32 [#allocation10], 4
      %s479 = int_to_ptr.vmem [resolvable:$true] %s478
      %484 = dma.vmem_to_hbm [thread:$0]  %s479, 384, %s4, [#allocation4], 128, 128, 8
    $region37: #{tpu_custom_call.1} parent=1 // pred_fallthru
      _
    // Predicated region
    $region38: #{tpu_custom_call.1} parent=1 // pred_check
      _
    $region39: #{tpu_custom_call.1} parent=1 // pred_check_branch
      %486 = sbr.rel (0) target = $region41
    $region40: #{tpu_custom_call.1} parent=1 // pred_region
      %s488 = ssub.s32 384, 384
      %489 = vsyncadd [#allocation12], %s488
      %s490 = sshll.u32 [#allocation11], 4
      %s491 = int_to_ptr.vmem [resolvable:$true] %s490
      %496 = dma.vmem_to_hbm [thread:$0]  %s491, 384, %s5, [#allocation12], 128, 128, 8
    $region41: #{tpu_custom_call.1} parent=1 // pred_fallthru
      _
    // Predicated region
    $region42: #{tpu_custom_call.1} parent=1 // pred_check
      _
    $region43: #{tpu_custom_call.1} parent=1 // pred_check_branch
      %498 = sbr.rel (0) target = $region45
    $region44: #{tpu_custom_call.1} parent=1 // pred_region
      %499 = dma.done [#allocation4], 384
    $region45: #{tpu_custom_call.1} parent=1 // pred_fallthru
      _
    // Predicated region
    $region46: #{tpu_custom_call.1} parent=1 // pred_check
      _
    $region47: #{tpu_custom_call.1} parent=1 // pred_check_branch
      %501 = sbr.rel (0) target = $region49
    $region48: #{tpu_custom_call.1} parent=1 // pred_region
      %502 = dma.done [#allocation12], 384
    $region49: #{tpu_custom_call.1} parent=1 // pred_fallthru
      _
    %503 = vsyncpa [#allocation3], 1
    %504 = vsyncpa [#allocation6], 1
    %505 = vsyncpa [#allocation9], 1
    %506 = vsyncpa [#allocation4], 1
    %507 = vsyncpa [#allocation12], 1

</llo_original>
